<compile_context>
chip_gen: v6e
topology: v6e:2x2x1
jax: 0.10.0
libtpu: 0.0.40
codegen_flags: <defaults>
</compile_context>

<pallas_src>
import functools

import jax
import jax.numpy as jnp
from jax import lax
from jax.experimental import pallas as pl
from jax.experimental.pallas import tpu as pltpu

NEG_SLOPE = 0.01  # torch.nn.LeakyReLU default negative_slope


def _leaky_relu(x):
    return jnp.where(x >= 0, x, NEG_SLOPE * x)


def _round_up(n, m):
    return ((n + m - 1) // m) * m


def _vmem_capacity_bytes():
    try:
        info = pltpu.get_tpu_info()
        cap = getattr(info, "vmem_capacity_bytes", None)
        if cap:
            return int(cap)
    except Exception:
        pass
    return 64 * 2**20  # conservative default (v7x per-core VMEM)


# ---------------------------------------------------------------------------
# Kernel
# ---------------------------------------------------------------------------
def causal_block_kernel(*refs, TL, K, dilation, pad, pad_r, has_proj, fold_taps):
    """One (batch, L-tile) per grid step.

    x_hist / h_hist are persistent VMEM scratch of shape (pad_r + TL, C):
      rows [pad_r - pad, pad_r)  : causal history (previous tile's last rows,
                                   zeros at the start of each sequence)
      rows [pad_r, pad_r + TL)   : current tile
    pad_r is pad rounded up to the sublane packing so the big TL-row writes
    stay aligned.  Requires TL >= pad (enforced in the wrapper).
    """
    if has_proj:
        (x_ref, w1_ref, b1_ref, w2_ref, b2_ref, wr_ref, br_ref,
         out_ref, x_hist, h_hist) = refs
    else:
        (x_ref, w1_ref, b1_ref, w2_ref, b2_ref,
         out_ref, x_hist, h_hist) = refs
        wr_ref = br_ref = None

    l = pl.program_id(1)
    base = pad_r - pad
    c_in_p = x_hist.shape[-1]
    c_out_p = h_hist.shape[-1]

    # Reset causal history (left zero padding) at the start of each sequence.
    if pad > 0:
        @pl.when(l == 0)
        def _init():
            x_hist[0:pad_r, :] = jnp.zeros((pad_r, c_in_p), x_hist.dtype)
            h_hist[0:pad_r, :] = jnp.zeros((pad_r, c_out_p), h_hist.dtype)

    x_tile = x_ref[0]                                   # (TL, C_in_p)
    if pad > 0:
        x_hist[pad_r:pad_r + TL, :] = x_tile

    def conv(hist_ref, tile_val, w_ref, b_ref):
        """Causal dilated conv + bias, f32 accumulation on the MXU.

        The last tap (t = K-1) is exactly the current tile, so it always uses
        the in-register `tile_val` instead of re-reading VMEM scratch.
        """
        c = tile_val.shape[-1]
        if pad == 0 or K == 1:
            acc = jnp.dot(tile_val, w_ref[...],
                          preferred_element_type=jnp.float32)
        elif fold_taps:
            # im2col slab (TL, K*C): one deep MXU contraction (v6e/v7x).
            pieces = [hist_ref[base + t * dilation: base + t * dilation + TL, :]
                      for t in range(K - 1)] + [tile_val]
            acc = jnp.dot(jnp.concatenate(pieces, axis=-1), w_ref[...],
                          preferred_element_type=jnp.float32)
        else:
            # K accumulating dots (native 128-deep contraction, better on v5e).
            acc = jnp.dot(tile_val, w_ref[(K - 1) * c:K * c, :],
                          preferred_element_type=jnp.float32)
            for t in range(K - 1):
                tap = hist_ref[base + t * dilation: base + t * dilation + TL, :]
                acc = acc + jnp.dot(tap, w_ref[t * c:(t + 1) * c, :],
                                    preferred_element_type=jnp.float32)
        return acc + b_ref[...]

    # --- conv1: causal dilated conv + bias + LeakyReLU ----------------------
    h32 = _leaky_relu(conv(x_hist, x_tile, w1_ref, b1_ref))
    h = h32.astype(h_hist.dtype)
    if pad > 0:
        h_hist[pad_r:pad_r + TL, :] = h

    # --- conv2: causal dilated conv on the hidden state ---------------------
    g = _leaky_relu(conv(h_hist, h, w2_ref, b2_ref))

    # --- residual branch -----------------------------------------------------
    if has_proj:                         # 1x1 conv projection
        res = jnp.dot(x_tile, wr_ref[...],
                      preferred_element_type=jnp.float32) + br_ref[...]
    else:                                # identity: no MXU pass, no eye matmul
        res = x_tile.astype(jnp.float32)

    # final=False -> no last activation
    out_ref[0] = (g + res).astype(out_ref.dtype)

    # Carry the last `pad` rows into the history slot for the next tile.
    if pad > 0:
        @pl.when(l + 1 < pl.num_programs(1))
        def _carry():
            x_hist[base:pad_r, :] = x_hist[base + TL: pad_r + TL, :]
            h_hist[base:pad_r, :] = h_hist[base + TL: pad_r + TL, :]


# ---------------------------------------------------------------------------
# Wrapper
# ---------------------------------------------------------------------------
def causal_convolution_block(x, params, *, kernel_size, dilation,
                             compute_dtype=jnp.bfloat16, tile_l=None,
                             fold_taps=True):
    """Forward of CausalConvolutionBlock (final=False).

    x: (B, C_in, L), torch layout.
    params: torch-layout effective (post weight-norm) parameters
        w1 (C_out, C_in, K), b1 (C_out,), w2 (C_out, C_out, K), b2 (C_out,),
        wr (C_out, C_in, 1) or None, br (C_out,) or None   (None <=> identity
        residual, i.e. in_channels == out_channels).
    tile_l=None  -> VMEM-budget-driven tile size (recommended).
    fold_taps    -> im2col single-matmul taps (v6e/v7x); False -> K
                    accumulating dots (v5e-friendly).
    Returns (B, C_out, L) in x.dtype.
    """
    w1, b1, w2, b2, wr, br = params
    B, C_in, L = x.shape
    C_out = w1.shape[0]
    K = kernel_size
    pad = (K - 1) * dilation
    has_proj = wr is not None
    if not has_proj:
        assert C_in == C_out, "identity residual needs in_channels == out_channels"

    itemsize = jnp.dtype(compute_dtype).itemsize
    align = 8 * max(1, 4 // itemsize)            # sublane packing: 8 f32 / 16 bf16
    pad_r = _round_up(pad, align) if pad > 0 else align

    C_in_p = _round_up(C_in, 128)                # lane-dense channels
    C_out_p = _round_up(C_out, 128)

    # --- VMEM-budget-driven tile length along L -----------------------------
    vmem_cap = _vmem_capacity_bytes()
    budget = int(0.4 * vmem_cap)                 # ~25 MiB on v7x, ~51 MiB on v6e

    w_rows = K * (C_in_p + C_out_p) + (C_in_p if has_proj else 0)
    w_bytes = w_rows * C_out_p * itemsize
    fixed = (w_bytes                                   # weights (single-buffered)
             + 3 * C_out_p * 4                         # f32 biases
             + pad_r * (C_in_p + C_out_p) * itemsize)  # halo rows of the scratch
    slab_row = K * (C_in_p + C_out_p) * itemsize if (fold_taps and pad > 0) else 0
    hist_row = (C_in_p + C_out_p) * itemsize if pad > 0 else 0
    per_row = (2 * C_in_p * itemsize                   # x block, double-buffered
               + 2 * C_out_p * itemsize                # out block, double-buffered
               + hist_row + slab_row
               + 3 * C_out_p * 4 + C_out_p * itemsize)  # f32/h temporaries

    if tile_l is None:
        avail = max(budget - fixed, per_row * align)
        TL = min(max((avail // per_row) // align * align, align), 2048)
    else:
        TL = max(align, _round_up(tile_l, align))
    # Correctness guard: the causal halo must fit in one previous tile.
    TL = max(TL, _round_up(pad, align) if pad > 0 else align)
    TL = min(TL, _round_up(L, align))
    Lp = _round_up(L, TL)
    num_l = Lp // TL
    assert num_l == 1 or TL >= pad, "tile too small for the causal receptive field"

    # --- activations: (B, C, L) -> channels-last, pad L & channels, cast ----
    x_lc = jnp.transpose(x, (0, 2, 1)).astype(compute_dtype)
    x_p = jnp.pad(x_lc, ((0, 0), (0, Lp - L), (0, C_in_p - C_in)))

    # --- conv weights: (C_out, C_in, K) -> flattened (K*C_in_p, C_out_p) ----
    def conv_weight(w):
        co, ci, k = w.shape
        wk = jnp.transpose(w, (2, 1, 0))                         # (K, C_in, C_out)
        ci_p = _round_up(ci, 128)
        wk = jnp.pad(wk, ((0, 0), (0, ci_p - ci), (0, C_out_p - co)))
        return wk.reshape(k * ci_p, C_out_p).astype(compute_dtype)

    w1_k = conv_weight(w1)
    w2_k = conv_weight(w2)

    def pad_bias(b):                                             # f32 biases
        return jnp.pad(b, (0, C_out_p - C_out)).reshape(1, C_out_p).astype(jnp.float32)

    b1_k, b2_k = pad_bias(b1), pad_bias(b2)
    if has_proj:
        wr_m = jnp.transpose(wr[:, :, 0], (1, 0))                # (C_in, C_out)
        wr_k = jnp.pad(wr_m, ((0, C_in_p - C_in),
                              (0, C_out_p - C_out))).astype(compute_dtype)
        br_k = pad_bias(br if br is not None
                        else jnp.zeros((C_out,), jnp.float32))

    kernel = functools.partial(causal_block_kernel, TL=TL, K=K,
                               dilation=dilation, pad=pad, pad_r=pad_r,
                               has_proj=has_proj, fold_taps=fold_taps)

    hist_rows = pad_r + TL if pad > 0 else align

    # --- generation-aware VMEM limit (no hard 32 MiB cap) -------------------
    needed = fixed + per_row * TL
    vmem_limit = int(min(max(1.5 * needed, 16 * 2**20), 0.9 * vmem_cap))
    vmem_limit = min(max(vmem_limit, int(1.25 * needed)), vmem_cap)

    flops = 2 * B * Lp * C_out_p * (K * C_in_p + K * C_out_p
                                    + (C_in_p if has_proj else 0))
    bytes_accessed = (x_p.size * itemsize + B * Lp * C_out_p * itemsize
                      + w_bytes + 3 * C_out_p * 4)

    def _call(single_buffer_weights):
        def const_spec(shape):
            nd = len(shape)
            kwargs = ({"pipeline_mode": pl.Buffered(1)}
                      if single_buffer_weights else {})
            return pl.BlockSpec(shape, lambda b, l: (0,) * nd, **kwargs)

        in_specs = [pl.BlockSpec((1, TL, C_in_p), lambda b, l: (b, l, 0)),
                    const_spec((K * C_in_p, C_out_p)),
                    const_spec((1, C_out_p)),
                    const_spec((K * C_out_p, C_out_p)),
                    const_spec((1, C_out_p))]
        args = [x_p, w1_k, b1_k, w2_k, b2_k]
        if has_proj:
            in_specs += [const_spec((C_in_p, C_out_p)), const_spec((1, C_out_p))]
            args += [wr_k, br_k]

        limit = vmem_limit if single_buffer_weights else min(vmem_limit + w_bytes,
                                                             vmem_cap)
        return pl.pallas_call(
            kernel,
            out_shape=jax.ShapeDtypeStruct((B, Lp, C_out_p), compute_dtype),
            grid=(B, num_l),
            in_specs=in_specs,
            out_specs=pl.BlockSpec((1, TL, C_out_p), lambda b, l: (b, l, 0)),
            scratch_shapes=[
                pltpu.VMEM((hist_rows, C_in_p), compute_dtype),   # x history carry
                pltpu.VMEM((hist_rows, C_out_p), compute_dtype),  # h history carry
            ],
            compiler_params=pltpu.CompilerParams(
                dimension_semantics=("parallel", "arbitrary"),
                vmem_limit_bytes=int(limit)),
            cost_estimate=pl.CostEstimate(flops=int(flops), transcendentals=0,
                                          bytes_accessed=int(bytes_accessed)),
        )(*args)

    try:
        out = _call(True)
    except Exception:
        # Fallback for Pallas versions that don't plumb BlockSpec.pipeline_mode
        # through pallas_call: identical kernel, default double-buffered weights.
        out = _call(False)

    out = out[:, :L, :C_out].astype(x.dtype)
    return jnp.transpose(out, (0, 2, 1))                         # back to (B, C_out, L)


# ---------------------------------------------------------------------------
# Parameter construction (mirrors torch.nn.utils.weight_norm, dim=0)
# ---------------------------------------------------------------------------
def _weight_norm_effective(v, g):
    norm = jnp.sqrt(jnp.sum(v * v, axis=(1, 2), keepdims=True))
    return g[:, None, None] * v / norm


def make_params(key, in_channels, out_channels, kernel_size):
    ks = jax.random.split(key, 7)
    v1 = jax.random.normal(ks[0], (out_channels, in_channels, kernel_size), jnp.float32) * 0.3
    g1 = 1.0 + 0.1 * jax.random.normal(ks[1], (out_channels,), jnp.float32)
    b1 = 0.1 * jax.random.normal(ks[2], (out_channels,), jnp.float32)
    v2 = jax.random.normal(ks[3], (out_channels, out_channels, kernel_size), jnp.float32) * 0.3
    g2 = 1.0 + 0.1 * jax.random.normal(ks[4], (out_channels,), jnp.float32)
    b2 = 0.1 * jax.random.normal(ks[5], (out_channels,), jnp.float32)
    w1 = _weight_norm_effective(v1, g1)
    w2 = _weight_norm_effective(v2, g2)
    if in_channels == out_channels:        # upordownsample is None in the module
        wr, br = None, None
    else:
        wr = jax.random.normal(ks[6], (out_channels, in_channels, 1), jnp.float32) * 0.3
        br = jnp.zeros((out_channels,), jnp.float32)
    return (w1, b1, w2, b2, wr, br)


# ---------------------------------------------------------------------------
# Pure-JAX reference (mirrors the PyTorch module exactly)
# ---------------------------------------------------------------------------
def reference_forward(x, params, *, kernel_size, dilation):
    w1, b1, w2, b2, wr, br = params
    pad = (kernel_size - 1) * dilation
    L = x.shape[-1]
    dn = ('NCH', 'OIH', 'NCH')

    def conv(inp, w, b, d, p):
        out = lax.conv_general_dilated(inp, w, window_strides=(1,),
                                       padding=[(p, p)], rhs_dilation=(d,),
                                       dimension_numbers=dn)
        return out + b[None, :, None]

    h = conv(x, w1, b1, dilation, pad)[:, :, :L]     # Chomp1d
    h = jnp.where(h >= 0, h, NEG_SLOPE * h)
    g = conv(h, w2, b2, dilation, pad)[:, :, :L]
    g = jnp.where(g >= 0, g, NEG_SLOPE * g)
    res = x if wr is None else conv(x, wr, br, 1, 0)
    return g + res                                   # final=False: no last activation


if __name__ == "__main__":
    key = jax.random.PRNGKey(0)
    K, d = 3, 2

    # Config 1: in != out (1x1 residual conv), bf16 MXU path, im2col taps,
    # auto (VMEM-budget-driven) tile size.
    B, C_in, C_out, L = 2, 4, 8, 16
    k1, k2, key = jax.random.split(key, 3)
    x = jax.random.normal(k1, (B, C_in, L), jnp.float32)
    params = make_params(k2, C_in, C_out, K)
    out = causal_convolution_block(x, params, kernel_size=K, dilation=d,
                                   compute_dtype=jnp.bfloat16)
    out = jax.block_until_ready(out)
    ref = reference_forward(x, params, kernel_size=K, dilation=d)
    assert out.shape == (B, C_out, L)
    err = jnp.max(jnp.abs(out - ref))
    assert jnp.allclose(out, ref, atol=1e-1, rtol=1e-1), f"bf16 max err {err}"

    # Config 2: in == out (identity residual, no projection matmul), multiple
    # L tiles -> exercises the causal-history carry; per-tap-dot (v5e) path;
    # f32 for an exact check.
    B2, C2, L2 = 2, 8, 40
    k3, k4, key = jax.random.split(key, 3)
    x2 = jax.random.normal(k3, (B2, C2, L2), jnp.float32)
    params2 = make_params(k4, C2, C2, K)
    out2 = causal_convolution_block(x2, params2, kernel_size=K, dilation=d,
                                    compute_dtype=jnp.float32, tile_l=16,
                                    fold_taps=False)
    out2 = jax.block_until_ready(out2)
    ref2 = reference_forward(x2, params2, kernel_size=K, dilation=d)
    assert out2.shape == (B2, C2, L2)
    err2 = jnp.max(jnp.abs(out2 - ref2))
    assert jnp.allclose(out2, ref2, atol=1e-4, rtol=1e-4), f"f32 max err {err2}"

    print("KERNEL_OK")
</pallas_src>

<mosaic_0001>
module attributes {stable_mosaic.version = 11 : i64} {
  func.func @causal_block_kernel(%arg0: i32, %arg1: i32, %arg2: memref<1x16x128xbf16, #tpu.memory_space<vmem>>, %arg3: memref<384x128xbf16, #tpu.memory_space<vmem>>, %arg4: memref<1x128xf32, #tpu.memory_space<vmem>>, %arg5: memref<384x128xbf16, #tpu.memory_space<vmem>>, %arg6: memref<1x128xf32, #tpu.memory_space<vmem>>, %arg7: memref<128x128xbf16, #tpu.memory_space<vmem>>, %arg8: memref<1x128xf32, #tpu.memory_space<vmem>>, %arg9: memref<1x16x128xbf16, #tpu.memory_space<vmem>>, %arg10: memref<32x128xbf16, #tpu.memory_space<vmem>>, %arg11: memref<32x128xbf16, #tpu.memory_space<vmem>>) attributes {dimension_semantics = [#tpu.dimension_semantics<parallel>, #tpu.dimension_semantics<arbitrary>], iteration_bounds = array<i64: 2, 1>, scalar_prefetch = 0 : i64, scratch_operands = 2 : i64, tpu.core_type = #tpu.core_type<tc>, window_params = [{transform_indices = @transform_0, window_bounds = array<i64: 1, 16, 128>}, {pipeline_mode = #tpu.pipeline_mode<synchronous>, transform_indices = @transform_1, window_bounds = array<i64: 384, 128>}, {pipeline_mode = #tpu.pipeline_mode<synchronous>, transform_indices = @transform_2, window_bounds = array<i64: 1, 128>}, {pipeline_mode = #tpu.pipeline_mode<synchronous>, transform_indices = @transform_3, window_bounds = array<i64: 384, 128>}, {pipeline_mode = #tpu.pipeline_mode<synchronous>, transform_indices = @transform_4, window_bounds = array<i64: 1, 128>}, {pipeline_mode = #tpu.pipeline_mode<synchronous>, transform_indices = @transform_5, window_bounds = array<i64: 128, 128>}, {pipeline_mode = #tpu.pipeline_mode<synchronous>, transform_indices = @transform_6, window_bounds = array<i64: 1, 128>}, {transform_indices = @transform_7, window_bounds = array<i64: 1, 16, 128>}]} {
    %c0_i32 = arith.constant 0 : i32
    %0 = arith.cmpi eq, %arg1, %c0_i32 : i32
    %1 = arith.extui %0 : i1 to i32
    %c0_i32_0 = arith.constant 0 : i32
    %2 = arith.cmpi ne, %1, %c0_i32_0 : i32
    scf.if %2 {
      %cst_35 = arith.constant 0.000000e+00 : bf16
      %48 = vector.broadcast %cst_35 : bf16 to vector<16x128xbf16>
      %c0_36 = arith.constant 0 : index
      %c0_37 = arith.constant 0 : index
      %49 = vector.load %arg10[%c0_36, %c0_37] : memref<32x128xbf16, #tpu.memory_space<vmem>>, vector<16x128xbf16>
      tpu.vector_store %arg10[%c0_36, %c0_37], %48 {strides = array<i32>} : memref<32x128xbf16, #tpu.memory_space<vmem>>, vector<16x128xbf16>,
      %cst_38 = arith.constant 0.000000e+00 : bf16
      %50 = vector.broadcast %cst_38 : bf16 to vector<16x128xbf16>
      %c0_39 = arith.constant 0 : index
      %c0_40 = arith.constant 0 : index
      %51 = vector.load %arg11[%c0_39, %c0_40] : memref<32x128xbf16, #tpu.memory_space<vmem>>, vector<16x128xbf16>
      tpu.vector_store %arg11[%c0_39, %c0_40], %50 {strides = array<i32>} : memref<32x128xbf16, #tpu.memory_space<vmem>>, vector<16x128xbf16>,
    } else {
    }
    %c0 = arith.constant 0 : index
    %c0_1 = arith.constant 0 : index
    %c0_2 = arith.constant 0 : index
    %3 = vector.load %arg2[%c0, %c0_1, %c0_2] : memref<1x16x128xbf16, #tpu.memory_space<vmem>>, vector<1x16x128xbf16>
    %4 = vector.shape_cast %3 : vector<1x16x128xbf16> to vector<16x128xbf16>
    %c16 = arith.constant 16 : index
    %c0_3 = arith.constant 0 : index
    %5 = vector.load %arg10[%c16, %c0_3] : memref<32x128xbf16, #tpu.memory_space<vmem>>, vector<16x128xbf16>
    tpu.vector_store %arg10[%c16, %c0_3], %4 {strides = array<i32>} : memref<32x128xbf16, #tpu.memory_space<vmem>>, vector<16x128xbf16>,
    %c12 = arith.constant 12 : index
    %c0_4 = arith.constant 0 : index
    %6 = vector.load %arg10[%c12, %c0_4] : memref<32x128xbf16, #tpu.memory_space<vmem>>, vector<16x128xbf16>
    %c14 = arith.constant 14 : index
    %c0_5 = arith.constant 0 : index
    %7 = vector.load %arg10[%c14, %c0_5] : memref<32x128xbf16, #tpu.memory_space<vmem>>, vector<16x128xbf16>
    %8 = tpu.concatenate %6, %7, %4 in 1 : vector<16x128xbf16>, vector<16x128xbf16>, vector<16x128xbf16> -> vector<16x384xbf16>
    %c0_6 = arith.constant 0 : index
    %c0_7 = arith.constant 0 : index
    %9 = vector.load %arg3[%c0_6, %c0_7] : memref<384x128xbf16, #tpu.memory_space<vmem>>, vector<384x128xbf16>
    %cst = arith.constant dense<0.000000e+00> : vector<16x128xf32>
    %10 = tpu.matmul %8, %9, %cst {dimension_numbers = #tpu.dot_dimension_numbers<[1], [0], [0], [1], [0, 0, 1, 1], [], []>} : vector<16x384xbf16>, vector<384x128xbf16>, vector<16x128xf32> -> vector<16x128xf32>
    %c0_8 = arith.constant 0 : index
    %c0_9 = arith.constant 0 : index
    %11 = vector.load %arg4[%c0_8, %c0_9] : memref<1x128xf32, #tpu.memory_space<vmem>>, vector<1x128xf32>
    %12 = vector.broadcast %11 : vector<1x128xf32> to vector<16x128xf32>
    %13 = arith.addf %10, %12 : vector<16x128xf32>
    %cst_10 = arith.constant 0.000000e+00 : f32
    %14 = vector.broadcast %cst_10 : f32 to vector<16x128xf32>
    %15 = arith.cmpf oge, %13, %14 : vector<16x128xf32>
    %cst_11 = arith.constant 0.00999999977 : f32
    %16 = vector.broadcast %cst_11 : f32 to vector<16x128xf32>
    %17 = arith.mulf %16, %13 : vector<16x128xf32>
    %18 = arith.select %15, %13, %17 : vector<16x128xi1>, vector<16x128xf32>
    %19 = arith.truncf %18 : vector<16x128xf32> to vector<16x128xbf16>
    %c16_12 = arith.constant 16 : index
    %c0_13 = arith.constant 0 : index
    %20 = vector.load %arg11[%c16_12, %c0_13] : memref<32x128xbf16, #tpu.memory_space<vmem>>, vector<16x128xbf16>
    tpu.vector_store %arg11[%c16_12, %c0_13], %19 {strides = array<i32>} : memref<32x128xbf16, #tpu.memory_space<vmem>>, vector<16x128xbf16>,
    %c12_14 = arith.constant 12 : index
    %c0_15 = arith.constant 0 : index
    %21 = vector.load %arg11[%c12_14, %c0_15] : memref<32x128xbf16, #tpu.memory_space<vmem>>, vector<16x128xbf16>
    %c14_16 = arith.constant 14 : index
    %c0_17 = arith.constant 0 : index
    %22 = vector.load %arg11[%c14_16, %c0_17] : memref<32x128xbf16, #tpu.memory_space<vmem>>, vector<16x128xbf16>
    %23 = tpu.concatenate %21, %22, %19 in 1 : vector<16x128xbf16>, vector<16x128xbf16>, vector<16x128xbf16> -> vector<16x384xbf16>
    %c0_18 = arith.constant 0 : index
    %c0_19 = arith.constant 0 : index
    %24 = vector.load %arg5[%c0_18, %c0_19] : memref<384x128xbf16, #tpu.memory_space<vmem>>, vector<384x128xbf16>
    %cst_20 = arith.constant dense<0.000000e+00> : vector<16x128xf32>
    %25 = tpu.matmul %23, %24, %cst_20 {dimension_numbers = #tpu.dot_dimension_numbers<[1], [0], [0], [1], [0, 0, 1, 1], [], []>} : vector<16x384xbf16>, vector<384x128xbf16>, vector<16x128xf32> -> vector<16x128xf32>
    %c0_21 = arith.constant 0 : index
    %c0_22 = arith.constant 0 : index
    %26 = vector.load %arg6[%c0_21, %c0_22] : memref<1x128xf32, #tpu.memory_space<vmem>>, vector<1x128xf32>
    %27 = vector.broadcast %26 : vector<1x128xf32> to vector<16x128xf32>
    %28 = arith.addf %25, %27 : vector<16x128xf32>
    %cst_23 = arith.constant 0.000000e+00 : f32
    %29 = vector.broadcast %cst_23 : f32 to vector<16x128xf32>
    %30 = arith.cmpf oge, %28, %29 : vector<16x128xf32>
    %cst_24 = arith.constant 0.00999999977 : f32
    %31 = vector.broadcast %cst_24 : f32 to vector<16x128xf32>
    %32 = arith.mulf %31, %28 : vector<16x128xf32>
    %33 = arith.select %30, %28, %32 : vector<16x128xi1>, vector<16x128xf32>
    %c0_25 = arith.constant 0 : index
    %c0_26 = arith.constant 0 : index
    %34 = vector.load %arg7[%c0_25, %c0_26] : memref<128x128xbf16, #tpu.memory_space<vmem>>, vector<128x128xbf16>
    %cst_27 = arith.constant dense<0.000000e+00> : vector<16x128xf32>
    %35 = tpu.matmul %4, %34, %cst_27 {dimension_numbers = #tpu.dot_dimension_numbers<[1], [0], [0], [1], [0, 0, 1, 1], [], []>} : vector<16x128xbf16>, vector<128x128xbf16>, vector<16x128xf32> -> vector<16x128xf32>
    %c0_28 = arith.constant 0 : index
    %c0_29 = arith.constant 0 : index
    %36 = vector.load %arg8[%c0_28, %c0_29] : memref<1x128xf32, #tpu.memory_space<vmem>>, vector<1x128xf32>
    %37 = vector.broadcast %36 : vector<1x128xf32> to vector<16x128xf32>
    %38 = arith.addf %35, %37 : vector<16x128xf32>
    %39 = arith.addf %33, %38 : vector<16x128xf32>
    %40 = arith.truncf %39 : vector<16x128xf32> to vector<16x128xbf16>
    %c0_30 = arith.constant 0 : index
    %c0_31 = arith.constant 0 : index
    %c0_32 = arith.constant 0 : index
    %41 = vector.load %arg9[%c0_30, %c0_31, %c0_32] : memref<1x16x128xbf16, #tpu.memory_space<vmem>>, vector<1x16x128xbf16>
    %42 = vector.shape_cast %41 : vector<1x16x128xbf16> to vector<16x128xbf16>
    %43 = vector.shape_cast %40 : vector<16x128xbf16> to vector<1x16x128xbf16>
    tpu.vector_store %arg9[%c0_30, %c0_31, %c0_32], %43 {strides = array<i32>} : memref<1x16x128xbf16, #tpu.memory_space<vmem>>, vector<1x16x128xbf16>,
    %c1_i32 = arith.constant 1 : i32
    %44 = arith.addi %arg1, %c1_i32 : i32
    %c1_i32_33 = arith.constant 1 : i32
    %45 = arith.cmpi slt, %44, %c1_i32_33 : i32
    %46 = arith.extui %45 : i1 to i32
    %c0_i32_34 = arith.constant 0 : i32
    %47 = arith.cmpi ne, %46, %c0_i32_34 : i32
    scf.if %47 {
      %c28 = arith.constant 28 : index
      %c0_35 = arith.constant 0 : index
      %48 = vector.load %arg10[%c28, %c0_35] : memref<32x128xbf16, #tpu.memory_space<vmem>>, vector<4x128xbf16>
      %c12_36 = arith.constant 12 : index
      %c0_37 = arith.constant 0 : index
      %49 = vector.load %arg10[%c12_36, %c0_37] : memref<32x128xbf16, #tpu.memory_space<vmem>>, vector<4x128xbf16>
      tpu.vector_store %arg10[%c12_36, %c0_37], %48 {strides = array<i32>} : memref<32x128xbf16, #tpu.memory_space<vmem>>, vector<4x128xbf16>,
      %c28_38 = arith.constant 28 : index
      %c0_39 = arith.constant 0 : index
      %50 = vector.load %arg11[%c28_38, %c0_39] : memref<32x128xbf16, #tpu.memory_space<vmem>>, vector<4x128xbf16>
      %c12_40 = arith.constant 12 : index
      %c0_41 = arith.constant 0 : index
      %51 = vector.load %arg11[%c12_40, %c0_41] : memref<32x128xbf16, #tpu.memory_space<vmem>>, vector<4x128xbf16>
      tpu.vector_store %arg11[%c12_40, %c0_41], %50 {strides = array<i32>} : memref<32x128xbf16, #tpu.memory_space<vmem>>, vector<4x128xbf16>,
    } else {
    }
    return
  }
  func.func @transform_0(%arg0: i32, %arg1: i32) -> (i32, i32, i32) {
    %c0_i32 = arith.constant 0 : i32
    %c0_i32_0 = arith.constant 0 : i32
    return %arg0, %arg1, %c0_i32 : i32, i32, i32
  }
  func.func @transform_1(%arg0: i32, %arg1: i32) -> (i32, i32) {
    %c0_i32 = arith.constant 0 : i32
    %c0_i32_0 = arith.constant 0 : i32
    %c0_i32_1 = arith.constant 0 : i32
    return %c0_i32, %c0_i32_0 : i32, i32
  }
  func.func @transform_2(%arg0: i32, %arg1: i32) -> (i32, i32) {
    %c0_i32 = arith.constant 0 : i32
    %c0_i32_0 = arith.constant 0 : i32
    %c0_i32_1 = arith.constant 0 : i32
    return %c0_i32, %c0_i32_0 : i32, i32
  }
  func.func @transform_3(%arg0: i32, %arg1: i32) -> (i32, i32) {
    %c0_i32 = arith.constant 0 : i32
    %c0_i32_0 = arith.constant 0 : i32
    %c0_i32_1 = arith.constant 0 : i32
    return %c0_i32, %c0_i32_0 : i32, i32
  }
  func.func @transform_4(%arg0: i32, %arg1: i32) -> (i32, i32) {
    %c0_i32 = arith.constant 0 : i32
    %c0_i32_0 = arith.constant 0 : i32
    %c0_i32_1 = arith.constant 0 : i32
    return %c0_i32, %c0_i32_0 : i32, i32
  }
  func.func @transform_5(%arg0: i32, %arg1: i32) -> (i32, i32) {
    %c0_i32 = arith.constant 0 : i32
    %c0_i32_0 = arith.constant 0 : i32
    %c0_i32_1 = arith.constant 0 : i32
    return %c0_i32, %c0_i32_0 : i32, i32
  }
  func.func @transform_6(%arg0: i32, %arg1: i32) -> (i32, i32) {
    %c0_i32 = arith.constant 0 : i32
    %c0_i32_0 = arith.constant 0 : i32
    %c0_i32_1 = arith.constant 0 : i32
    return %c0_i32, %c0_i32_0 : i32, i32
  }
  func.func @transform_7(%arg0: i32, %arg1: i32) -> (i32, i32, i32) {
    %c0_i32 = arith.constant 0 : i32
    %c0_i32_0 = arith.constant 0 : i32
    return %arg0, %arg1, %c0_i32 : i32, i32, i32
  }
}

module attributes {stable_mosaic.version = 11 : i64} {
  func.func @causal_block_kernel(%arg0: i32, %arg1: i32, %arg2: memref<1x16x128xbf16, #tpu.memory_space<vmem>>, %arg3: memref<384x128xbf16, #tpu.memory_space<vmem>>, %arg4: memref<1x128xf32, #tpu.memory_space<vmem>>, %arg5: memref<384x128xbf16, #tpu.memory_space<vmem>>, %arg6: memref<1x128xf32, #tpu.memory_space<vmem>>, %arg7: memref<128x128xbf16, #tpu.memory_space<vmem>>, %arg8: memref<1x128xf32, #tpu.memory_space<vmem>>, %arg9: memref<1x16x128xbf16, #tpu.memory_space<vmem>>, %arg10: memref<32x128xbf16, #tpu.memory_space<vmem>>, %arg11: memref<32x128xbf16, #tpu.memory_space<vmem>>) attributes {dimension_semantics = [#tpu.dimension_semantics<parallel>, #tpu.dimension_semantics<arbitrary>], iteration_bounds = array<i64: 2, 1>, scalar_prefetch = 0 : i64, scratch_operands = 2 : i64, tpu.core_type = #tpu.core_type<tc>, window_params = [{transform_indices = @transform_0, window_bounds = array<i64: 1, 16, 128>}, {pipeline_mode = #tpu.pipeline_mode<synchronous>, transform_indices = @transform_1, window_bounds = array<i64: 384, 128>}, {pipeline_mode = #tpu.pipeline_mode<synchronous>, transform_indices = @transform_2, window_bounds = array<i64: 1, 128>}, {pipeline_mode = #tpu.pipeline_mode<synchronous>, transform_indices = @transform_3, window_bounds = array<i64: 384, 128>}, {pipeline_mode = #tpu.pipeline_mode<synchronous>, transform_indices = @transform_4, window_bounds = array<i64: 1, 128>}, {pipeline_mode = #tpu.pipeline_mode<synchronous>, transform_indices = @transform_5, window_bounds = array<i64: 128, 128>}, {pipeline_mode = #tpu.pipeline_mode<synchronous>, transform_indices = @transform_6, window_bounds = array<i64: 1, 128>}, {transform_indices = @transform_7, window_bounds = array<i64: 1, 16, 128>}]} {
    %c0_i32 = arith.constant 0 : i32
    %0 = arith.cmpi eq, %arg1, %c0_i32 : i32
    %1 = arith.extui %0 : i1 to i32
    %c0_i32_0 = arith.constant 0 : i32
    %2 = arith.cmpi ne, %1, %c0_i32_0 : i32
    scf.if %2 {
      %cst_35 = arith.constant 0.000000e+00 : bf16
      %48 = vector.broadcast %cst_35 : bf16 to vector<16x128xbf16>
      %c0_36 = arith.constant 0 : index
      %c0_37 = arith.constant 0 : index
      %49 = vector.load %arg10[%c0_36, %c0_37] : memref<32x128xbf16, #tpu.memory_space<vmem>>, vector<16x128xbf16>
      tpu.vector_store %arg10[%c0_36, %c0_37], %48 {strides = array<i32>} : memref<32x128xbf16, #tpu.memory_space<vmem>>, vector<16x128xbf16>,
      %cst_38 = arith.constant 0.000000e+00 : bf16
      %50 = vector.broadcast %cst_38 : bf16 to vector<16x128xbf16>
      %c0_39 = arith.constant 0 : index
      %c0_40 = arith.constant 0 : index
      %51 = vector.load %arg11[%c0_39, %c0_40] : memref<32x128xbf16, #tpu.memory_space<vmem>>, vector<16x128xbf16>
      tpu.vector_store %arg11[%c0_39, %c0_40], %50 {strides = array<i32>} : memref<32x128xbf16, #tpu.memory_space<vmem>>, vector<16x128xbf16>,
    } else {
    }
    %c0 = arith.constant 0 : index
    %c0_1 = arith.constant 0 : index
    %c0_2 = arith.constant 0 : index
    %3 = vector.load %arg2[%c0, %c0_1, %c0_2] : memref<1x16x128xbf16, #tpu.memory_space<vmem>>, vector<1x16x128xbf16>
    %4 = vector.shape_cast %3 : vector<1x16x128xbf16> to vector<16x128xbf16>
    %c16 = arith.constant 16 : index
    %c0_3 = arith.constant 0 : index
    %5 = vector.load %arg10[%c16, %c0_3] : memref<32x128xbf16, #tpu.memory_space<vmem>>, vector<16x128xbf16>
    tpu.vector_store %arg10[%c16, %c0_3], %4 {strides = array<i32>} : memref<32x128xbf16, #tpu.memory_space<vmem>>, vector<16x128xbf16>,
    %c12 = arith.constant 12 : index
    %c0_4 = arith.constant 0 : index
    %6 = vector.load %arg10[%c12, %c0_4] : memref<32x128xbf16, #tpu.memory_space<vmem>>, vector<16x128xbf16>
    %c14 = arith.constant 14 : index
    %c0_5 = arith.constant 0 : index
    %7 = vector.load %arg10[%c14, %c0_5] : memref<32x128xbf16, #tpu.memory_space<vmem>>, vector<16x128xbf16>
    %8 = tpu.concatenate %6, %7, %4 in 1 : vector<16x128xbf16>, vector<16x128xbf16>, vector<16x128xbf16> -> vector<16x384xbf16>
    %c0_6 = arith.constant 0 : index
    %c0_7 = arith.constant 0 : index
    %9 = vector.load %arg3[%c0_6, %c0_7] : memref<384x128xbf16, #tpu.memory_space<vmem>>, vector<384x128xbf16>
    %cst = arith.constant dense<0.000000e+00> : vector<16x128xf32>
    %10 = tpu.matmul %8, %9, %cst {dimension_numbers = #tpu.dot_dimension_numbers<[1], [0], [0], [1], [0, 0, 1, 1], [], []>} : vector<16x384xbf16>, vector<384x128xbf16>, vector<16x128xf32> -> vector<16x128xf32>
    %c0_8 = arith.constant 0 : index
    %c0_9 = arith.constant 0 : index
    %11 = vector.load %arg4[%c0_8, %c0_9] : memref<1x128xf32, #tpu.memory_space<vmem>>, vector<1x128xf32>
    %12 = vector.broadcast %11 : vector<1x128xf32> to vector<16x128xf32>
    %13 = arith.addf %10, %12 : vector<16x128xf32>
    %cst_10 = arith.constant 0.000000e+00 : f32
    %14 = vector.broadcast %cst_10 : f32 to vector<16x128xf32>
    %15 = arith.cmpf oge, %13, %14 : vector<16x128xf32>
    %cst_11 = arith.constant 0.00999999977 : f32
    %16 = vector.broadcast %cst_11 : f32 to vector<16x128xf32>
    %17 = arith.mulf %16, %13 : vector<16x128xf32>
    %18 = arith.select %15, %13, %17 : vector<16x128xi1>, vector<16x128xf32>
    %19 = arith.truncf %18 : vector<16x128xf32> to vector<16x128xbf16>
    %c16_12 = arith.constant 16 : index
    %c0_13 = arith.constant 0 : index
    %20 = vector.load %arg11[%c16_12, %c0_13] : memref<32x128xbf16, #tpu.memory_space<vmem>>, vector<16x128xbf16>
    tpu.vector_store %arg11[%c16_12, %c0_13], %19 {strides = array<i32>} : memref<32x128xbf16, #tpu.memory_space<vmem>>, vector<16x128xbf16>,
    %c12_14 = arith.constant 12 : index
    %c0_15 = arith.constant 0 : index
    %21 = vector.load %arg11[%c12_14, %c0_15] : memref<32x128xbf16, #tpu.memory_space<vmem>>, vector<16x128xbf16>
    %c14_16 = arith.constant 14 : index
    %c0_17 = arith.constant 0 : index
    %22 = vector.load %arg11[%c14_16, %c0_17] : memref<32x128xbf16, #tpu.memory_space<vmem>>, vector<16x128xbf16>
    %23 = tpu.concatenate %21, %22, %19 in 1 : vector<16x128xbf16>, vector<16x128xbf16>, vector<16x128xbf16> -> vector<16x384xbf16>
    %c0_18 = arith.constant 0 : index
    %c0_19 = arith.constant 0 : index
    %24 = vector.load %arg5[%c0_18, %c0_19] : memref<384x128xbf16, #tpu.memory_space<vmem>>, vector<384x128xbf16>
    %cst_20 = arith.constant dense<0.000000e+00> : vector<16x128xf32>
    %25 = tpu.matmul %23, %24, %cst_20 {dimension_numbers = #tpu.dot_dimension_numbers<[1], [0], [0], [1], [0, 0, 1, 1], [], []>} : vector<16x384xbf16>, vector<384x128xbf16>, vector<16x128xf32> -> vector<16x128xf32>
    %c0_21 = arith.constant 0 : index
    %c0_22 = arith.constant 0 : index
    %26 = vector.load %arg6[%c0_21, %c0_22] : memref<1x128xf32, #tpu.memory_space<vmem>>, vector<1x128xf32>
    %27 = vector.broadcast %26 : vector<1x128xf32> to vector<16x128xf32>
    %28 = arith.addf %25, %27 : vector<16x128xf32>
    %cst_23 = arith.constant 0.000000e+00 : f32
    %29 = vector.broadcast %cst_23 : f32 to vector<16x128xf32>
    %30 = arith.cmpf oge, %28, %29 : vector<16x128xf32>
    %cst_24 = arith.constant 0.00999999977 : f32
    %31 = vector.broadcast %cst_24 : f32 to vector<16x128xf32>
    %32 = arith.mulf %31, %28 : vector<16x128xf32>
    %33 = arith.select %30, %28, %32 : vector<16x128xi1>, vector<16x128xf32>
    %c0_25 = arith.constant 0 : index
    %c0_26 = arith.constant 0 : index
    %34 = vector.load %arg7[%c0_25, %c0_26] : memref<128x128xbf16, #tpu.memory_space<vmem>>, vector<128x128xbf16>
    %cst_27 = arith.constant dense<0.000000e+00> : vector<16x128xf32>
    %35 = tpu.matmul %4, %34, %cst_27 {dimension_numbers = #tpu.dot_dimension_numbers<[1], [0], [0], [1], [0, 0, 1, 1], [], []>} : vector<16x128xbf16>, vector<128x128xbf16>, vector<16x128xf32> -> vector<16x128xf32>
    %c0_28 = arith.constant 0 : index
    %c0_29 = arith.constant 0 : index
    %36 = vector.load %arg8[%c0_28, %c0_29] : memref<1x128xf32, #tpu.memory_space<vmem>>, vector<1x128xf32>
    %37 = vector.broadcast %36 : vector<1x128xf32> to vector<16x128xf32>
    %38 = arith.addf %35, %37 : vector<16x128xf32>
    %39 = arith.addf %33, %38 : vector<16x128xf32>
    %40 = arith.truncf %39 : vector<16x128xf32> to vector<16x128xbf16>
    %c0_30 = arith.constant 0 : index
    %c0_31 = arith.constant 0 : index
    %c0_32 = arith.constant 0 : index
    %41 = vector.load %arg9[%c0_30, %c0_31, %c0_32] : memref<1x16x128xbf16, #tpu.memory_space<vmem>>, vector<1x16x128xbf16>
    %42 = vector.shape_cast %41 : vector<1x16x128xbf16> to vector<16x128xbf16>
    %43 = vector.shape_cast %40 : vector<16x128xbf16> to vector<1x16x128xbf16>
    tpu.vector_store %arg9[%c0_30, %c0_31, %c0_32], %43 {strides = array<i32>} : memref<1x16x128xbf16, #tpu.memory_space<vmem>>, vector<1x16x128xbf16>,
    %c1_i32 = arith.constant 1 : i32
    %44 = arith.addi %arg1, %c1_i32 : i32
    %c1_i32_33 = arith.constant 1 : i32
    %45 = arith.cmpi slt, %44, %c1_i32_33 : i32
    %46 = arith.extui %45 : i1 to i32
    %c0_i32_34 = arith.constant 0 : i32
    %47 = arith.cmpi ne, %46, %c0_i32_34 : i32
    scf.if %47 {
      %c28 = arith.constant 28 : index
      %c0_35 = arith.constant 0 : index
      %48 = vector.load %arg10[%c28, %c0_35] : memref<32x128xbf16, #tpu.memory_space<vmem>>, vector<4x128xbf16>
      %c12_36 = arith.constant 12 : index
      %c0_37 = arith.constant 0 : index
      %49 = vector.load %arg10[%c12_36, %c0_37] : memref<32x128xbf16, #tpu.memory_space<vmem>>, vector<4x128xbf16>
      tpu.vector_store %arg10[%c12_36, %c0_37], %48 {strides = array<i32>} : memref<32x128xbf16, #tpu.memory_space<vmem>>, vector<4x128xbf16>,
      %c28_38 = arith.constant 28 : index
      %c0_39 = arith.constant 0 : index
      %50 = vector.load %arg11[%c28_38, %c0_39] : memref<32x128xbf16, #tpu.memory_space<vmem>>, vector<4x128xbf16>
      %c12_40 = arith.constant 12 : index
      %c0_41 = arith.constant 0 : index
      %51 = vector.load %arg11[%c12_40, %c0_41] : memref<32x128xbf16, #tpu.memory_space<vmem>>, vector<4x128xbf16>
      tpu.vector_store %arg11[%c12_40, %c0_41], %50 {strides = array<i32>} : memref<32x128xbf16, #tpu.memory_space<vmem>>, vector<4x128xbf16>,
    } else {
    }
    return
  }
  func.func @transform_0(%arg0: i32, %arg1: i32) -> (i32, i32, i32) {
    %c0_i32 = arith.constant 0 : i32
    %c0_i32_0 = arith.constant 0 : i32
    return %arg0, %arg1, %c0_i32 : i32, i32, i32
  }
  func.func @transform_1(%arg0: i32, %arg1: i32) -> (i32, i32) {
    %c0_i32 = arith.constant 0 : i32
    %c0_i32_0 = arith.constant 0 : i32
    %c0_i32_1 = arith.constant 0 : i32
    return %c0_i32, %c0_i32_0 : i32, i32
  }
  func.func @transform_2(%arg0: i32, %arg1: i32) -> (i32, i32) {
    %c0_i32 = arith.constant 0 : i32
    %c0_i32_0 = arith.constant 0 : i32
    %c0_i32_1 = arith.constant 0 : i32
    return %c0_i32, %c0_i32_0 : i32, i32
  }
  func.func @transform_3(%arg0: i32, %arg1: i32) -> (i32, i32) {
    %c0_i32 = arith.constant 0 : i32
    %c0_i32_0 = arith.constant 0 : i32
    %c0_i32_1 = arith.constant 0 : i32
    return %c0_i32, %c0_i32_0 : i32, i32
  }
  func.func @transform_4(%arg0: i32, %arg1: i32) -> (i32, i32) {
    %c0_i32 = arith.constant 0 : i32
    %c0_i32_0 = arith.constant 0 : i32
    %c0_i32_1 = arith.constant 0 : i32
    return %c0_i32, %c0_i32_0 : i32, i32
  }
  func.func @transform_5(%arg0: i32, %arg1: i32) -> (i32, i32) {
    %c0_i32 = arith.constant 0 : i32
    %c0_i32_0 = arith.constant 0 : i32
    %c0_i32_1 = arith.constant 0 : i32
    return %c0_i32, %c0_i32_0 : i32, i32
  }
  func.func @transform_6(%arg0: i32, %arg1: i32) -> (i32, i32) {
    %c0_i32 = arith.constant 0 : i32
    %c0_i32_0 = arith.constant 0 : i32
    %c0_i32_1 = arith.constant 0 : i32
    return %c0_i32, %c0_i32_0 : i32, i32
  }
  func.func @transform_7(%arg0: i32, %arg1: i32) -> (i32, i32, i32) {
    %c0_i32 = arith.constant 0 : i32
    %c0_i32_0 = arith.constant 0 : i32
    return %arg0, %arg1, %c0_i32 : i32, i32, i32
  }
}

</mosaic_0001>

<llo_original>
// kernel: tpu_custom_call.1
$region0: #{tpu_custom_call.1}
  #allocation0 [shape = 'u32[]', space=smem, size = 0x4, offset = 0x4, fixed_abs, tag = 'smem constant byte address 0x4 - core index']
  #allocation1 [shape = 'u32[144,128]{1,0:T(1,128)}', space=vmem, size = 0x12000, scoped, tag = 'internal scratch']
  #allocation2 [shape = 'bf16[32,128]{1,0:T(8,128)(2,1)}', space=vmem, size = 0x2000, scoped, tag = 'scratch operand']
  #allocation3 [shape = 'bf16[32,128]{1,0:T(8,128)(2,1)}', space=vmem, size = 0x2000, scoped, tag = 'scratch operand']
  %s0 = inlined_call_operand.hbm [shape: bf16[2,16,128], index: 0, kind: input, shape index: {}]
  %s1 = inlined_call_operand.hbm [shape: bf16[384,128], index: 1, kind: input, shape index: {}]
  %s2 = inlined_call_operand.vmem [shape: f32[1,128], index: 2, kind: input, shape index: {}]
  %s3 = inlined_call_operand.hbm [shape: bf16[384,128], index: 3, kind: input, shape index: {}]
  %s4 = inlined_call_operand.vmem [shape: f32[1,128], index: 4, kind: input, shape index: {}]
  %s5 = inlined_call_operand.hbm [shape: bf16[128,128], index: 5, kind: input, shape index: {}]
  %s6 = inlined_call_operand.vmem [shape: f32[1,128], index: 6, kind: input, shape index: {}]
  %s7 = inlined_call_operand.hbm [shape: bf16[2,16,128], index: 7, kind: output, shape index: {}]
  %s8 = sld [smem:[#allocation0]]
  $region85: #{tpu_custom_call.1} parent=0
    _
  %s10 = ssub.s32 1, %s8
  %s11 = scalar_select 0, %s10, %s8
  $region1: #{tpu_custom_call.1} parent=0
    #allocation4 [shape = 'u8[8192]{0}', space=vmem, size = 0x2000, scoped, tag = 'input window, operand 0']
    #allocation5 [shape = 's32[2]{0}', space=sflag, size = 0x8, scoped, tag = 'scoped memory for tpu_custom_call.1']
    #allocation6 [shape = 's32[2]{0}', space=sflag, size = 0x8, scoped, tag = 'scoped memory for tpu_custom_call.1']
    #allocation7 [shape = 'u8[98304]{0}', space=vmem, size = 0x18000, scoped, tag = 'input window, operand 1, single buffered']
    #allocation8 [shape = 's32[1]{0}', space=sflag, size = 0x4, scoped, tag = 'scoped memory for tpu_custom_call.1']
    #allocation9 [shape = 'u8[98304]{0}', space=vmem, size = 0x18000, scoped, tag = 'input window, operand 3, single buffered']
    #allocation10 [shape = 'u8[32768]{0}', space=vmem, size = 0x8000, scoped, tag = 'input window, operand 5, single buffered']
    #allocation11 [shape = 's32[1]{0}', space=sflag, size = 0x4, scoped, tag = 'scoped memory for tpu_custom_call.1']
    #allocation12 [shape = 'u8[8192]{0}', space=vmem, size = 0x2000, scoped, tag = 'output window, operand 0']
    %12 = vsyncpa [#allocation5], 0
    %s13 = scalar_lea.sflag [#allocation5], 1
    %14 = vsyncpa %s13, 0
    %15 = vsyncpa [#allocation8], 0
    %16 = vsyncpa [#allocation11], 0
    %17 = vsyncpa [#allocation6], 0
    %s18 = scalar_lea.sflag [#allocation6], 1
    %19 = vsyncpa %s18, 0
    loop: start=0, step=1, limit=4
    $region2: #{tpu_custom_call.1} parent=1 // loop_pre_header
      _
    $region3: #{tpu_custom_call.1} parent=1 // loop_header
      %s21 = sphi 0, %s25
      %p22 = scmp.ge.s32.totalorder %s21, 4
      %s28 = sphi 0, %s40
      %s29 = sphi 0, %s36
      %s30 = sphi 0, %s28
      %s31 = sphi 0, %s29
      %s32 = sphi 0, %s30
      %s33 = sphi 0, %s31
      %s45 = sphi 0, %s47
      %s48 = sphi 0, %s45
      %s49 = sphi 0, %s48
      %s65 = sphi 0, %s49
      %s69 = sphi 0, %s69
      %s71 = sphi 0, %s69
      %s72 = sphi 0, %s71
      %s86 = sphi 0, %s72
      %s90 = sphi 0, %s90
      %s92 = sphi 0, %s90
      %s93 = sphi 0, %s92
      %s107 = sphi 0, %s93
      %s111 = sphi 0, %s111
      %s113 = sphi 0, %s111
      %s114 = sphi 0, %s113
      %s128 = sphi 0, %s114
      %s132 = sphi 0, %s132
      %s134 = sphi 0, %s132
      %s135 = sphi 0, %s134
      %s149 = sphi 0, %s135
      %s153 = sphi 0, %s153
      %s155 = sphi 0, %s153
      %s156 = sphi 0, %s155
      %s170 = sphi 0, %s156
      %s174 = sphi 0, %s174
      %s176 = sphi 0, %s174
      %s177 = sphi 0, %s176
      %s191 = sphi 0, %s177
      %s199 = sphi 0, %s201
      %s202 = sphi 0, %s199
      %s203 = sphi 0, %s202
      %s219 = sphi 0, %s203
    $region4: #{tpu_custom_call.1} parent=1 // loop_header_branch
      %24 = sbr.rel (%p22) target = $region8
    $region5: #{tpu_custom_call.1} parent=1 // loop_body
      %s26 = ssub.s32 %s21, 1
      %s27 = ssub.s32 %s21, 2
      %s34 = sadd.s32 1, %s29
      %p35 = scmp.ge.s32.totalorder %s34, 1
      %s36 = scalar_select %p35, 0, %s34
      %s37 = sadd.s32 1, %s28
      %s38 = scalar_select %p35, %s37, %s28
      %p39 = scmp.ge.s32.totalorder %s38, 2
      %s40 = scalar_select %p39, 0, %s38
      %s41 = ssub.s32 %s28, %s40
      %s42 = ssub.s32 %s29, %s36
      %s43 = sor.u32 %s41, %s42
      %p44 = scmp.eq.s32.totalorder %s43, 0
      %s46 = sadd.s32 %s45, 1
      %s47 = scalar_select %p44, %s45, %s46
      %p50 = pneg %p44
      %p51 = scmp.eq.s32.totalorder %s21, 1
      %p52 = por %p50, %p51
      %p53 = scmp.ne.s32.totalorder %s45, %s48
      %p54 = scmp.eq.s32.totalorder %s21, 0
      %p55 = por %p53, %p54
      %p56 = scmp.ne.s32.totalorder %s45, %s48
      %p57 = scmp.eq.s32.totalorder %s26, 1
      %p58 = por %p56, %p57
      %p59 = scmp.ne.s32.totalorder %s48, %s49
      %p60 = scmp.eq.s32.totalorder %s26, 0
      %p61 = por %p59, %p60
      %p62 = scmp.ne.s32.totalorder %s48, %s49
      %p63 = scmp.eq.s32.totalorder %s27, 1
      %p64 = por %p62, %p63
      %p66 = scmp.ne.s32.totalorder %s49, %s65
      %p67 = scmp.eq.s32.totalorder %s27, 0
      %p68 = por %p66, %p67
      %s70 = sadd.s32 %s69, 1
      %p73 = scmp.eq.s32.totalorder %s21, 1
      %p74 = scmp.ne.s32.totalorder %s69, %s71
      %p75 = scmp.eq.s32.totalorder %s21, 0
      %p76 = por %p74, %p75
      %p77 = scmp.ne.s32.totalorder %s69, %s71
      %p78 = scmp.eq.s32.totalorder %s26, 1
      %p79 = por %p77, %p78
      %p80 = scmp.ne.s32.totalorder %s71, %s72
      %p81 = scmp.eq.s32.totalorder %s26, 0
      %p82 = por %p80, %p81
      %p83 = scmp.ne.s32.totalorder %s71, %s72
      %p84 = scmp.eq.s32.totalorder %s27, 1
      %p85 = por %p83, %p84
      %p87 = scmp.ne.s32.totalorder %s72, %s86
      %p88 = scmp.eq.s32.totalorder %s27, 0
      %p89 = por %p87, %p88
      %s91 = sadd.s32 %s90, 1
      %p94 = scmp.eq.s32.totalorder %s21, 1
      %p95 = scmp.ne.s32.totalorder %s90, %s92
      %p96 = scmp.eq.s32.totalorder %s21, 0
      %p97 = por %p95, %p96
      %p98 = scmp.ne.s32.totalorder %s90, %s92
      %p99 = scmp.eq.s32.totalorder %s26, 1
      %p100 = por %p98, %p99
      %p101 = scmp.ne.s32.totalorder %s92, %s93
      %p102 = scmp.eq.s32.totalorder %s26, 0
      %p103 = por %p101, %p102
      %p104 = scmp.ne.s32.totalorder %s92, %s93
      %p105 = scmp.eq.s32.totalorder %s27, 1
      %p106 = por %p104, %p105
      %p108 = scmp.ne.s32.totalorder %s93, %s107
      %p109 = scmp.eq.s32.totalorder %s27, 0
      %p110 = por %p108, %p109
      %s112 = sadd.s32 %s111, 1
      %p115 = scmp.eq.s32.totalorder %s21, 1
      %p116 = scmp.ne.s32.totalorder %s111, %s113
      %p117 = scmp.eq.s32.totalorder %s21, 0
      %p118 = por %p116, %p117
      %p119 = scmp.ne.s32.totalorder %s111, %s113
      %p120 = scmp.eq.s32.totalorder %s26, 1
      %p121 = por %p119, %p120
      %p122 = scmp.ne.s32.totalorder %s113, %s114
      %p123 = scmp.eq.s32.totalorder %s26, 0
      %p124 = por %p122, %p123
      %p125 = scmp.ne.s32.totalorder %s113, %s114
      %p126 = scmp.eq.s32.totalorder %s27, 1
      %p127 = por %p125, %p126
      %p129 = scmp.ne.s32.totalorder %s114, %s128
      %p130 = scmp.eq.s32.totalorder %s27, 0
      %p131 = por %p129, %p130
      %s133 = sadd.s32 %s132, 1
      %p136 = scmp.eq.s32.totalorder %s21, 1
      %p137 = scmp.ne.s32.totalorder %s132, %s134
      %p138 = scmp.eq.s32.totalorder %s21, 0
      %p139 = por %p137, %p138
      %p140 = scmp.ne.s32.totalorder %s132, %s134
      %p141 = scmp.eq.s32.totalorder %s26, 1
      %p142 = por %p140, %p141
      %p143 = scmp.ne.s32.totalorder %s134, %s135
      %p144 = scmp.eq.s32.totalorder %s26, 0
      %p145 = por %p143, %p144
      %p146 = scmp.ne.s32.totalorder %s134, %s135
      %p147 = scmp.eq.s32.totalorder %s27, 1
      %p148 = por %p146, %p147
      %p150 = scmp.ne.s32.totalorder %s135, %s149
      %p151 = scmp.eq.s32.totalorder %s27, 0
      %p152 = por %p150, %p151
      %s154 = sadd.s32 %s153, 1
      %p157 = scmp.eq.s32.totalorder %s21, 1
      %p158 = scmp.ne.s32.totalorder %s153, %s155
      %p159 = scmp.eq.s32.totalorder %s21, 0
      %p160 = por %p158, %p159
      %p161 = scmp.ne.s32.totalorder %s153, %s155
      %p162 = scmp.eq.s32.totalorder %s26, 1
      %p163 = por %p161, %p162
      %p164 = scmp.ne.s32.totalorder %s155, %s156
      %p165 = scmp.eq.s32.totalorder %s26, 0
      %p166 = por %p164, %p165
      %p167 = scmp.ne.s32.totalorder %s155, %s156
      %p168 = scmp.eq.s32.totalorder %s27, 1
      %p169 = por %p167, %p168
      %p171 = scmp.ne.s32.totalorder %s156, %s170
      %p172 = scmp.eq.s32.totalorder %s27, 0
      %p173 = por %p171, %p172
      %s175 = sadd.s32 %s174, 1
      %p178 = scmp.eq.s32.totalorder %s21, 1
      %p179 = scmp.ne.s32.totalorder %s174, %s176
      %p180 = scmp.eq.s32.totalorder %s21, 0
      %p181 = por %p179, %p180
      %p182 = scmp.ne.s32.totalorder %s174, %s176
      %p183 = scmp.eq.s32.totalorder %s26, 1
      %p184 = por %p182, %p183
      %p185 = scmp.ne.s32.totalorder %s176, %s177
      %p186 = scmp.eq.s32.totalorder %s26, 0
      %p187 = por %p185, %p186
      %p188 = scmp.ne.s32.totalorder %s176, %s177
      %p189 = scmp.eq.s32.totalorder %s27, 1
      %p190 = por %p188, %p189
      %p192 = scmp.ne.s32.totalorder %s177, %s191
      %p193 = scmp.eq.s32.totalorder %s27, 0
      %p194 = por %p192, %p193
      %s195 = ssub.s32 %s28, %s40
      %s196 = ssub.s32 %s29, %s36
      %s197 = sor.u32 %s195, %s196
      %p198 = scmp.eq.s32.totalorder %s197, 0
      %s200 = sadd.s32 %s199, 1
      %s201 = scalar_select %p198, %s199, %s200
      %p204 = pneg %p198
      %p205 = scmp.eq.s32.totalorder %s21, 1
      %p206 = por %p204, %p205
      %p207 = scmp.ne.s32.totalorder %s199, %s202
      %p208 = scmp.eq.s32.totalorder %s21, 0
      %p209 = por %p207, %p208
      %p210 = scmp.ne.s32.totalorder %s199, %s202
      %p211 = scmp.eq.s32.totalorder %s26, 1
      %p212 = por %p210, %p211
      %p213 = scmp.ne.s32.totalorder %s202, %s203
      %p214 = scmp.eq.s32.totalorder %s26, 0
      %p215 = por %p213, %p214
      %p216 = scmp.ne.s32.totalorder %s202, %s203
      %p217 = scmp.eq.s32.totalorder %s27, 1
      %p218 = por %p216, %p217
      %p220 = scmp.ne.s32.totalorder %s203, %s219
      %p221 = scmp.eq.s32.totalorder %s27, 0
      %p222 = por %p220, %p221
      %p223 = scmp.le.s32.totalorder 1, %s21
      %p224 = scmp.lt.s32.totalorder %s21, 3
      %p225 = pnand %p223, %p224
      %p226 = pneg %p225
      // Predicated region
      $region9: #{tpu_custom_call.1} parent=5 // pred_check
        _
      $region10: #{tpu_custom_call.1} parent=5 // pred_check_branch
        %228 = sbr.rel (%p225) target = $region12
      $region11: #{tpu_custom_call.1} parent=5 // pred_region
        %s229 = ssub.s32 %s21, 1
        // Predicated region
        $region13: #{tpu_custom_call.1} parent=11 // pred_check
          %p230 = pneg %p82
        $region14: #{tpu_custom_call.1} parent=11 // pred_check_branch
          %232 = sbr.rel (%p230) target = $region16
        $region15: #{tpu_custom_call.1} parent=11 // pred_region
          %s234 = ssub.s32 3072, 3072
          %235 = vsyncadd [#allocation8], %s234
          %s236 = sshll.u32 [#allocation7], 4
          %s237 = int_to_ptr.vmem [resolvable:$true] %s236
          %242 = dma.hbm_to_vmem [thread:$0]  %s1, 3072, %s237, [#allocation8], 64, 64, 4
        $region16: #{tpu_custom_call.1} parent=11 // pred_fallthru
          _
        // Predicated region
        $region17: #{tpu_custom_call.1} parent=11 // pred_check
          %p243 = pneg %p103
        $region18: #{tpu_custom_call.1} parent=11 // pred_check_branch
          %245 = sbr.rel (%p243) target = $region20
        $region19: #{tpu_custom_call.1} parent=11 // pred_region
          _
        $region20: #{tpu_custom_call.1} parent=11 // pred_fallthru
          _
        // Predicated region
        $region21: #{tpu_custom_call.1} parent=11 // pred_check
          %p246 = pneg %p124
        $region22: #{tpu_custom_call.1} parent=11 // pred_check_branch
          %248 = sbr.rel (%p246) target = $region24
        $region23: #{tpu_custom_call.1} parent=11 // pred_region
          %s250 = ssub.s32 3072, 3072
          %251 = vsyncadd [#allocation8], %s250
          %s252 = sshll.u32 [#allocation9], 4
          %s253 = int_to_ptr.vmem [resolvable:$true] %s252
          %258 = dma.hbm_to_vmem [thread:$0]  %s3, 3072, %s253, [#allocation8], 64, 64, 4
        $region24: #{tpu_custom_call.1} parent=11 // pred_fallthru
          _
        // Predicated region
        $region25: #{tpu_custom_call.1} parent=11 // pred_check
          %p259 = pneg %p145
        $region26: #{tpu_custom_call.1} parent=11 // pred_check_branch
          %261 = sbr.rel (%p259) target = $region28
        $region27: #{tpu_custom_call.1} parent=11 // pred_region
          _
        $region28: #{tpu_custom_call.1} parent=11 // pred_fallthru
          _
        // Predicated region
        $region29: #{tpu_custom_call.1} parent=11 // pred_check
          %p262 = pneg %p166
        $region30: #{tpu_custom_call.1} parent=11 // pred_check_branch
          %264 = sbr.rel (%p262) target = $region32
        $region31: #{tpu_custom_call.1} parent=11 // pred_region
          %s266 = ssub.s32 1024, 1024
          %267 = vsyncadd [#allocation11], %s266
          %s268 = sshll.u32 [#allocation10], 4
          %s269 = int_to_ptr.vmem [resolvable:$true] %s268
          %274 = dma.hbm_to_vmem [thread:$0]  %s5, 1024, %s269, [#allocation11], 64, 64, 4
        $region32: #{tpu_custom_call.1} parent=11 // pred_fallthru
          _
        // Predicated region
        $region33: #{tpu_custom_call.1} parent=11 // pred_check
          %p275 = pneg %p187
        $region34: #{tpu_custom_call.1} parent=11 // pred_check_branch
          %277 = sbr.rel (%p275) target = $region36
        $region35: #{tpu_custom_call.1} parent=11 // pred_region
          _
        $region36: #{tpu_custom_call.1} parent=11 // pred_fallthru
          _
      $region12: #{tpu_custom_call.1} parent=5 // pred_fallthru
        _
      %p278 = scmp.lt.s32.totalorder %s21, 2
      // Predicated region
      $region37: #{tpu_custom_call.1} parent=5 // pred_check
        %p279 = pneg %p278
      $region38: #{tpu_custom_call.1} parent=5 // pred_check_branch
        %281 = sbr.rel (%p279) target = $region40
      $region39: #{tpu_custom_call.1} parent=5 // pred_region
        // Predicated region
        $region41: #{tpu_custom_call.1} parent=39 // pred_check
          %p282 = pneg %p55
        $region42: #{tpu_custom_call.1} parent=39 // pred_check_branch
          %284 = sbr.rel (%p282) target = $region44
        $region43: #{tpu_custom_call.1} parent=39 // pred_region
          %s285 = sand.u32 %s45, 1
          %s286 = scalar_lea.sflag [#allocation5], %s285
          %s287 = sand.u32 %s45, 1
          %s288 = smul.addr %s287, 8
          %s289 = scalar_lea.vmem [#allocation4], %s288
          %s290 = smul.u32 2, %s29
          %s292 = ssub.s32 128, 128
          %293 = vsyncadd %s286, %s292
          %s294 = smul.addr %s28, 2
          %s295 = sadd.s32 %s290, %s294
          %s296 = smul.addr %s295, 64
          %s297 = scalar_lea.hbm %s0, %s296
          %s298 = sshll.u32 %s289, 4
          %s299 = int_to_ptr.vmem [resolvable:$true] %s298
          %304 = dma.hbm_to_vmem [thread:$0]  %s297, 128, %s299, %s286, 64, 64, 4
        $region44: #{tpu_custom_call.1} parent=39 // pred_fallthru
          _
      $region40: #{tpu_custom_call.1} parent=5 // pred_fallthru
        _
      %p305 = scmp.le.s32.totalorder 1, %s21
      %p306 = scmp.lt.s32.totalorder %s21, 3
      %p307 = pnand %p305, %p306
      %p308 = pneg %p307
      // Predicated region
      $region45: #{tpu_custom_call.1} parent=5 // pred_check
        _
      $region46: #{tpu_custom_call.1} parent=5 // pred_check_branch
        %310 = sbr.rel (%p307) target = $region48
      $region47: #{tpu_custom_call.1} parent=5 // pred_region
        %s311 = ssub.s32 %s21, 1
        %s312 = sand.u32 %s48, 1
        %s313 = scalar_lea.sflag [#allocation5], %s312
        %s314 = sand.u32 %s48, 1
        %s315 = smul.addr %s314, 8
        %s316 = scalar_lea.vmem [#allocation4], %s315
        // Predicated region
        $region49: #{tpu_custom_call.1} parent=47 // pred_check
          %p317 = pneg %p61
        $region50: #{tpu_custom_call.1} parent=47 // pred_check_branch
          %319 = sbr.rel (%p317) target = $region52
        $region51: #{tpu_custom_call.1} parent=47 // pred_region
          %320 = dma.done %s313, 128
        $region52: #{tpu_custom_call.1} parent=47 // pred_fallthru
          _
        // Predicated region
        $region53: #{tpu_custom_call.1} parent=47 // pred_check
          %p321 = pneg %p82
        $region54: #{tpu_custom_call.1} parent=47 // pred_check_branch
          %323 = sbr.rel (%p321) target = $region56
        $region55: #{tpu_custom_call.1} parent=47 // pred_region
          %324 = dma.done [#allocation8], 3072
        $region56: #{tpu_custom_call.1} parent=47 // pred_fallthru
          _
        // Predicated region
        $region57: #{tpu_custom_call.1} parent=47 // pred_check
          %p325 = pneg %p124
        $region58: #{tpu_custom_call.1} parent=47 // pred_check_branch
          %327 = sbr.rel (%p325) target = $region60
        $region59: #{tpu_custom_call.1} parent=47 // pred_region
          %328 = dma.done [#allocation8], 3072
        $region60: #{tpu_custom_call.1} parent=47 // pred_fallthru
          _
        // Predicated region
        $region61: #{tpu_custom_call.1} parent=47 // pred_check
          %p329 = pneg %p166
        $region62: #{tpu_custom_call.1} parent=47 // pred_check_branch
          %331 = sbr.rel (%p329) target = $region64
        $region63: #{tpu_custom_call.1} parent=47 // pred_region
          %332 = dma.done [#allocation11], 1024
        $region64: #{tpu_custom_call.1} parent=47 // pred_fallthru
          _
        %s333 = sand.u32 %s48, 1
        %s334 = scalar_lea.sflag [#allocation5], %s333
        %s335 = sand.u32 %s48, 1
        %s336 = smul.addr %s335, 8
        %s337 = scalar_lea.vmem [#allocation4], %s336
        %p338 = pneg %p61
        %p339 = pneg %p58
        %p340 = pneg %p82
        %p341 = pneg %p79
        %p342 = pneg %p103
        %p343 = pneg %p100
        %p344 = pneg %p124
        %p345 = pneg %p121
        %p346 = pneg %p145
        %p347 = pneg %p142
        %p348 = pneg %p166
        %p349 = pneg %p163
        %p350 = pneg %p187
        %p351 = pneg %p184
        %p352 = pneg %p215
        %p353 = pneg %p212
        %s354 = sand.u32 %s202, 1
        %s355 = scalar_lea.sflag [#allocation6], %s354
        %s356 = sand.u32 %s202, 1
        %s357 = smul.addr %s356, 8
        %s358 = scalar_lea.vmem [#allocation12], %s357
        %s359 = smul.u32 2, %s31
        %s360 = smul.u32 2, %s31
        %p362 = scmp.eq.s32.totalorder %s31, 0
        // Predicated region
        $region65: #{tpu_custom_call.1} parent=47 // pred_check
          %p363 = pneg %p362
        $region66: #{tpu_custom_call.1} parent=47 // pred_check_branch
          %365 = sbr.rel (%p363) target = $region68
        $region67: #{tpu_custom_call.1} parent=47 // pred_region
          %366 = vst [vmem:[#allocation2] sm:$0xf] 0
          %367 = vst [vmem:[#allocation2 + $0x4] sm:$0xf] 0
          %368 = vst [vmem:[#allocation3] sm:$0xf] 0
          %369 = vst [vmem:[#allocation3 + $0x4] sm:$0xf] 0
        $region68: #{tpu_custom_call.1} parent=47 // pred_fallthru
          _
        %v370 = vld [vmem:[%s316] sm:$0xf]
        %v371 = vld [vmem:[%s316 + $0x4] sm:$0xf]
        %372 = vst [vmem:[#allocation2 + $0x8] sm:$0xf] %v370
        %373 = vst [vmem:[#allocation2 + $0xc] sm:$0xf] %v371
        %v374 = vld [vmem:[#allocation2 + $0x4] sm:$0xc]
        %v375 = vld [vmem:[#allocation2 + $0x8] sm:$0xf]
        %v376 = vld [vmem:[#allocation2 + $0xc] sm:$0x3]
        %v377 = vld [vmem:[#allocation2 + $0x4] sm:$0x8]
        %v378 = vld [vmem:[#allocation2 + $0xc] sm:$0x7]
        %v382 = vunpack.c.l.b16 %v374
        %v383 = vunpack.c.l.b16 %v375
        %v384 = vunpack.c.l.b16 %v376
        %v385 = vpack.c.b16 %v383, %v382
        %v386 = vpack.c.b16 %v384, %v384
        %v389 = vunpack.c.l.b16 %v377
        %v390 = vunpack.c.l.b16 %v378
        %v391 = vpack.c.b16 %v383, %v389
        %v392 = vpack.c.b16 %v390, %v390
        %vm393 = vcmask 1046528
        %v394 = vrot.slane %v391, 1
        %v395 = vrot.slane %v392, 1
        %v396 = vsel %vm393, %v394, %v395
        %v399 = vunpack.c.l.b16 %v370
        %v400 = vunpack.c.l.b16 %v371
        %v401 = vpack.c.b16 %v400, %v399
        %v402 = vrot.slane %v401, 6
        %v403 = vld [vmem:[#allocation7] sm:$0xf]
        %v404 = vld [vmem:[#allocation7 + $0x4] sm:$0xf]
        %v405 = vld [vmem:[#allocation7 + $0x8] sm:$0xf]
        %v406 = vld [vmem:[#allocation7 + $0xc] sm:$0xf]
        %v407 = vld [vmem:[#allocation7 + $0x10] sm:$0xf]
        %v408 = vld [vmem:[#allocation7 + $0x14] sm:$0xf]
        %v409 = vld [vmem:[#allocation7 + $0x18] sm:$0xf]
        %v410 = vld [vmem:[#allocation7 + $0x1c] sm:$0xf]
        %v411 = vld [vmem:[#allocation7 + $0x20] sm:$0xf]
        %v412 = vld [vmem:[#allocation7 + $0x24] sm:$0xf]
        %v413 = vld [vmem:[#allocation7 + $0x28] sm:$0xf]
        %v414 = vld [vmem:[#allocation7 + $0x2c] sm:$0xf]
        %v415 = vld [vmem:[#allocation7 + $0x30] sm:$0xf]
        %v416 = vld [vmem:[#allocation7 + $0x34] sm:$0xf]
        %v417 = vld [vmem:[#allocation7 + $0x38] sm:$0xf]
        %v418 = vld [vmem:[#allocation7 + $0x3c] sm:$0xf]
        %v419 = vld [vmem:[#allocation7 + $0x40] sm:$0xf]
        %v420 = vld [vmem:[#allocation7 + $0x44] sm:$0xf]
        %v421 = vld [vmem:[#allocation7 + $0x48] sm:$0xf]
        %v422 = vld [vmem:[#allocation7 + $0x4c] sm:$0xf]
        %v423 = vld [vmem:[#allocation7 + $0x50] sm:$0xf]
        %v424 = vld [vmem:[#allocation7 + $0x54] sm:$0xf]
        %v425 = vld [vmem:[#allocation7 + $0x58] sm:$0xf]
        %v426 = vld [vmem:[#allocation7 + $0x5c] sm:$0xf]
        %v427 = vld [vmem:[#allocation7 + $0x60] sm:$0xf]
        %v428 = vld [vmem:[#allocation7 + $0x64] sm:$0xf]
        %v429 = vld [vmem:[#allocation7 + $0x68] sm:$0xf]
        %v430 = vld [vmem:[#allocation7 + $0x6c] sm:$0xf]
        %v431 = vld [vmem:[#allocation7 + $0x70] sm:$0xf]
        %v432 = vld [vmem:[#allocation7 + $0x74] sm:$0xf]
        %v433 = vld [vmem:[#allocation7 + $0x78] sm:$0xf]
        %v434 = vld [vmem:[#allocation7 + $0x7c] sm:$0xf]
        %v435 = vld [vmem:[#allocation7 + $0x80] sm:$0xf]
        %v436 = vld [vmem:[#allocation7 + $0x84] sm:$0xf]
        %v437 = vld [vmem:[#allocation7 + $0x88] sm:$0xf]
        %v438 = vld [vmem:[#allocation7 + $0x8c] sm:$0xf]
        %v439 = vld [vmem:[#allocation7 + $0x90] sm:$0xf]
        %v440 = vld [vmem:[#allocation7 + $0x94] sm:$0xf]
        %v441 = vld [vmem:[#allocation7 + $0x98] sm:$0xf]
        %v442 = vld [vmem:[#allocation7 + $0x9c] sm:$0xf]
        %v443 = vld [vmem:[#allocation7 + $0xa0] sm:$0xf]
        %v444 = vld [vmem:[#allocation7 + $0xa4] sm:$0xf]
        %v445 = vld [vmem:[#allocation7 + $0xa8] sm:$0xf]
        %v446 = vld [vmem:[#allocation7 + $0xac] sm:$0xf]
        %v447 = vld [vmem:[#allocation7 + $0xb0] sm:$0xf]
        %v448 = vld [vmem:[#allocation7 + $0xb4] sm:$0xf]
        %v449 = vld [vmem:[#allocation7 + $0xb8] sm:$0xf]
        %v450 = vld [vmem:[#allocation7 + $0xbc] sm:$0xf]
        %v451 = vld [vmem:[%s2] sm:$0x1]
        %v453 = vlaneseq
        %v454 = vshrl.u32 %v453, 7
        %v455 = vsub.s32 0, %v454
        %v456 = vrot.slane %v451, %v455
        %vm458 = vcmask 1045504
        %v459 = vrot.slane %v385, 2
        %v460 = vrot.slane %v386, 2
        %v461 = vsel %vm458, %v459, %v460
        %v462 = vrot.slane %v396, 2
        %v463 = vrot.slane %v395, 2
        %v464 = vsel %vm458, %v462, %v463
        %v465 = vrot.slane %v402, 2
        %v466 = vsel %vm458, %v465, %v465
        %v518 = vunpack.c.l.b16 %v403
        %v519 = vunpack.c.l.b16 %v404
        %v520 = vunpack.c.l.b16 %v405
        %v521 = vunpack.c.l.b16 %v406
        %v522 = vunpack.c.l.b16 %v407
        %v523 = vunpack.c.l.b16 %v408
        %v524 = vunpack.c.l.b16 %v409
        %v525 = vunpack.c.l.b16 %v410
        %v526 = vunpack.c.l.b16 %v411
        %v527 = vunpack.c.l.b16 %v412
        %v528 = vunpack.c.l.b16 %v413
        %v529 = vunpack.c.l.b16 %v414
        %v530 = vunpack.c.l.b16 %v415
        %v531 = vunpack.c.l.b16 %v416
        %v532 = vunpack.c.l.b16 %v417
        %v533 = vunpack.c.l.b16 %v418
        %v534 = vunpack.c.l.b16 %v419
        %v535 = vunpack.c.l.b16 %v420
        %v536 = vunpack.c.l.b16 %v421
        %v537 = vunpack.c.l.b16 %v422
        %v538 = vunpack.c.l.b16 %v423
        %v539 = vunpack.c.l.b16 %v424
        %v540 = vunpack.c.l.b16 %v425
        %v541 = vunpack.c.l.b16 %v426
        %v542 = vunpack.c.l.b16 %v427
        %v543 = vunpack.c.l.b16 %v428
        %v544 = vunpack.c.l.b16 %v429
        %v545 = vunpack.c.l.b16 %v430
        %v546 = vunpack.c.l.b16 %v431
        %v547 = vunpack.c.l.b16 %v432
        %v548 = vunpack.c.l.b16 %v433
        %v549 = vunpack.c.l.b16 %v434
        %v550 = vunpack.c.l.b16 %v435
        %v551 = vunpack.c.l.b16 %v436
        %v552 = vunpack.c.l.b16 %v437
        %v553 = vunpack.c.l.b16 %v438
        %v554 = vunpack.c.l.b16 %v439
        %v555 = vunpack.c.l.b16 %v440
        %v556 = vunpack.c.l.b16 %v441
        %v557 = vunpack.c.l.b16 %v442
        %v558 = vunpack.c.l.b16 %v443
        %v559 = vunpack.c.l.b16 %v444
        %v560 = vunpack.c.l.b16 %v445
        %v561 = vunpack.c.l.b16 %v446
        %v562 = vunpack.c.l.b16 %v447
        %v563 = vunpack.c.l.b16 %v448
        %v564 = vunpack.c.l.b16 %v449
        %v565 = vunpack.c.l.b16 %v450
        %v566 = vpack.c.b16 %v519, %v518
        %v567 = vpack.c.b16 %v521, %v520
        %v568 = vpack.c.b16 %v523, %v522
        %v569 = vpack.c.b16 %v525, %v524
        %v570 = vpack.c.b16 %v527, %v526
        %v571 = vpack.c.b16 %v529, %v528
        %v572 = vpack.c.b16 %v531, %v530
        %v573 = vpack.c.b16 %v533, %v532
        %v574 = vpack.c.b16 %v535, %v534
        %v575 = vpack.c.b16 %v537, %v536
        %v576 = vpack.c.b16 %v539, %v538
        %v577 = vpack.c.b16 %v541, %v540
        %v578 = vpack.c.b16 %v543, %v542
        %v579 = vpack.c.b16 %v545, %v544
        %v580 = vpack.c.b16 %v547, %v546
        %v581 = vpack.c.b16 %v549, %v548
        %v582 = vpack.c.b16 %v551, %v550
        %v583 = vpack.c.b16 %v553, %v552
        %v584 = vpack.c.b16 %v555, %v554
        %v585 = vpack.c.b16 %v557, %v556
        %v586 = vpack.c.b16 %v559, %v558
        %v587 = vpack.c.b16 %v561, %v560
        %v588 = vpack.c.b16 %v563, %v562
        %v589 = vpack.c.b16 %v565, %v564
        %614 = vmatprep.subr.bf16.mxu0 0
        %615 = vmatpush1.bf16.msra.mxu0 %v573
        %616 = vmatprep.subr.bf16.mxu0 0
        %617 = vmatpush1.bf16.msra.mxu0 %v572
        %618 = vmatprep.subr.bf16.mxu0 0
        %619 = vmatpush1.bf16.msra.mxu0 %v571
        %620 = vmatprep.subr.bf16.mxu0 0
        %621 = vmatpush1.bf16.msra.mxu0 %v570
        %622 = vmatprep.subr.bf16.mxu0 0
        %623 = vmatpush1.bf16.msra.mxu0 %v569
        %624 = vmatprep.subr.bf16.mxu0 0
        %625 = vmatpush1.bf16.msra.mxu0 %v568
        %626 = vmatprep.subr.bf16.mxu0 0
        %627 = vmatpush1.bf16.msra.mxu0 %v567
        %628 = vmatprep.subr.bf16.mxu0 0
        %629 = vmatpush1.bf16.msra.mxu0 %v566
        %630 = vmatprep.subr.bf16.mxu0 0
        %631 = vmatpush2.bf16.msra.mxu0 %v581
        %632 = vmatprep.subr.bf16.mxu0 0
        %633 = vmatpush2.bf16.msra.mxu0 %v580
        %634 = vmatprep.subr.bf16.mxu0 0
        %635 = vmatpush2.bf16.msra.mxu0 %v579
        %636 = vmatprep.subr.bf16.mxu0 0
        %637 = vmatpush2.bf16.msra.mxu0 %v578
        %638 = vmatprep.subr.bf16.mxu0 0
        %639 = vmatpush2.bf16.msra.mxu0 %v577
        %640 = vmatprep.subr.bf16.mxu0 0
        %641 = vmatpush2.bf16.msra.mxu0 %v576
        %642 = vmatprep.subr.bf16.mxu0 0
        %643 = vmatpush2.bf16.msra.mxu0 %v575
        %644 = vmatprep.subr.bf16.mxu0 0
        %645 = vmatpush2.bf16.msra.mxu0 %v574
        %646 = vmatprep.mubr.bf16.mxu0 %v464
        %647 = vmatmul.mubr.bf16.gmra.mxu0 %v461
        %v648 = vpop.f32.mrf.mxu0
        %v649 = vadd.f32 %v456, %v648
        %v650 = vpop.f32.mrf.mxu0
        %v651 = vpop.f32.mrf.mxu0
        %v652 = vadd.f32 %v456, %v651
        %v653 = vpop.f32.mrf.mxu0
        %654 = vdwg.mxu0
        %655 = vmatprep.subr.bf16.mxu0 0
        %656 = vmatpush1.bf16.msra.mxu0 %v589
        %657 = vmatprep.subr.bf16.mxu0 0
        %658 = vmatpush1.bf16.msra.mxu0 %v588
        %659 = vmatprep.subr.bf16.mxu0 0
        %660 = vmatpush1.bf16.msra.mxu0 %v587
        %661 = vmatprep.subr.bf16.mxu0 0
        %662 = vmatpush1.bf16.msra.mxu0 %v586
        %663 = vmatprep.subr.bf16.mxu0 0
        %664 = vmatpush1.bf16.msra.mxu0 %v585
        %665 = vmatprep.subr.bf16.mxu0 0
        %666 = vmatpush1.bf16.msra.mxu0 %v584
        %667 = vmatprep.subr.bf16.mxu0 0
        %668 = vmatpush1.bf16.msra.mxu0 %v583
        %669 = vmatprep.subr.bf16.mxu0 0
        %670 = vmatpush1.bf16.msra.mxu0 %v582
        %671 = vmatprep.subr.bf16.mxu0 0
        %672 = vmatpush2.bf16.msra.mxu0 0
        %673 = vmatprep.subr.bf16.mxu0 0
        %674 = vmatpush2.bf16.msra.mxu0 0
        %675 = vmatprep.subr.bf16.mxu0 0
        %676 = vmatpush2.bf16.msra.mxu0 0
        %677 = vmatprep.subr.bf16.mxu0 0
        %678 = vmatpush2.bf16.msra.mxu0 0
        %679 = vmatprep.subr.bf16.mxu0 0
        %680 = vmatpush2.bf16.msra.mxu0 0
        %681 = vmatprep.subr.bf16.mxu0 0
        %682 = vmatpush2.bf16.msra.mxu0 0
        %683 = vmatprep.subr.bf16.mxu0 0
        %684 = vmatpush2.bf16.msra.mxu0 0
        %685 = vmatprep.subr.bf16.mxu0 0
        %686 = vmatpush2.bf16.msra.mxu0 0
        %687 = vmatprep.mubr.bf16.mxu0 0
        %688 = vmatmul.mubr.bf16.gmra.mxu0 %v466
        %v689 = vpop.f32.mrf.mxu0
        %v690 = vadd.f32 %v649, %v689
        %v691 = vpop.f32.mrf.mxu0
        %v692 = vpop.f32.mrf.mxu0
        %v693 = vadd.f32 %v652, %v692
        %v694 = vpop.f32.mrf.mxu0
        %695 = vdwg.mxu0
        %vm696 = vcmp.ge.f32.partialorder %v690, 0.0
        %vm697 = vcmp.ge.f32.partialorder %v693, 0.0
        %v698 = vmul.f32 %v690, 0.01
        %v699 = vmul.f32 %v693, 0.01
        %v700 = vsel %vm696, %v690, %v698
        %v701 = vsel %vm697, %v693, %v699
        %v702 = vpack.c.bf16 %v701, %v700
        %v704 = vunpack.c.l.b16 %v702
        %v705 = vunpack.c.h.b16 %v702
        %v706 = vpack.c.b16 %v704, %v704
        %v707 = vpack.c.b16 %v705, %v705
        %710 = vst [vmem:[#allocation3 + $0x8] sm:$0xf] %v706
        %711 = vst [vmem:[#allocation3 + $0xc] sm:$0xf] %v707
        %v712 = vld [vmem:[#allocation3 + $0x4] sm:$0xc]
        %v713 = vld [vmem:[#allocation3 + $0x8] sm:$0xf]
        %v714 = vld [vmem:[#allocation3 + $0xc] sm:$0x3]
        %v715 = vld [vmem:[#allocation3 + $0x4] sm:$0x8]
        %v716 = vld [vmem:[#allocation3 + $0xc] sm:$0x7]
        %v720 = vunpack.c.l.b16 %v712
        %v721 = vunpack.c.l.b16 %v713
        %v722 = vunpack.c.l.b16 %v714
        %v723 = vpack.c.b16 %v721, %v720
        %v724 = vpack.c.b16 %v722, %v722
        %v727 = vunpack.c.l.b16 %v715
        %v728 = vunpack.c.l.b16 %v716
        %v729 = vpack.c.b16 %v721, %v727
        %v730 = vpack.c.b16 %v728, %v728
        %v731 = vrot.slane %v729, 1
        %v732 = vrot.slane %v730, 1
        %v733 = vsel %vm393, %v731, %v732
        %v734 = vrot.slane %v702, 6
        %v735 = vld [vmem:[#allocation9] sm:$0xf]
        %v736 = vld [vmem:[#allocation9 + $0x4] sm:$0xf]
        %v737 = vld [vmem:[#allocation9 + $0x8] sm:$0xf]
        %v738 = vld [vmem:[#allocation9 + $0xc] sm:$0xf]
        %v739 = vld [vmem:[#allocation9 + $0x10] sm:$0xf]
        %v740 = vld [vmem:[#allocation9 + $0x14] sm:$0xf]
        %v741 = vld [vmem:[#allocation9 + $0x18] sm:$0xf]
        %v742 = vld [vmem:[#allocation9 + $0x1c] sm:$0xf]
        %v743 = vld [vmem:[#allocation9 + $0x20] sm:$0xf]
        %v744 = vld [vmem:[#allocation9 + $0x24] sm:$0xf]
        %v745 = vld [vmem:[#allocation9 + $0x28] sm:$0xf]
        %v746 = vld [vmem:[#allocation9 + $0x2c] sm:$0xf]
        %v747 = vld [vmem:[#allocation9 + $0x30] sm:$0xf]
        %v748 = vld [vmem:[#allocation9 + $0x34] sm:$0xf]
        %v749 = vld [vmem:[#allocation9 + $0x38] sm:$0xf]
        %v750 = vld [vmem:[#allocation9 + $0x3c] sm:$0xf]
        %v751 = vld [vmem:[#allocation9 + $0x40] sm:$0xf]
        %v752 = vld [vmem:[#allocation9 + $0x44] sm:$0xf]
        %v753 = vld [vmem:[#allocation9 + $0x48] sm:$0xf]
        %v754 = vld [vmem:[#allocation9 + $0x4c] sm:$0xf]
        %v755 = vld [vmem:[#allocation9 + $0x50] sm:$0xf]
        %v756 = vld [vmem:[#allocation9 + $0x54] sm:$0xf]
        %v757 = vld [vmem:[#allocation9 + $0x58] sm:$0xf]
        %v758 = vld [vmem:[#allocation9 + $0x5c] sm:$0xf]
        %v759 = vld [vmem:[#allocation9 + $0x60] sm:$0xf]
        %v760 = vld [vmem:[#allocation9 + $0x64] sm:$0xf]
        %v761 = vld [vmem:[#allocation9 + $0x68] sm:$0xf]
        %v762 = vld [vmem:[#allocation9 + $0x6c] sm:$0xf]
        %v763 = vld [vmem:[#allocation9 + $0x70] sm:$0xf]
        %v764 = vld [vmem:[#allocation9 + $0x74] sm:$0xf]
        %v765 = vld [vmem:[#allocation9 + $0x78] sm:$0xf]
        %v766 = vld [vmem:[#allocation9 + $0x7c] sm:$0xf]
        %v767 = vld [vmem:[#allocation9 + $0x80] sm:$0xf]
        %v768 = vld [vmem:[#allocation9 + $0x84] sm:$0xf]
        %v769 = vld [vmem:[#allocation9 + $0x88] sm:$0xf]
        %v770 = vld [vmem:[#allocation9 + $0x8c] sm:$0xf]
        %v771 = vld [vmem:[#allocation9 + $0x90] sm:$0xf]
        %v772 = vld [vmem:[#allocation9 + $0x94] sm:$0xf]
        %v773 = vld [vmem:[#allocation9 + $0x98] sm:$0xf]
        %v774 = vld [vmem:[#allocation9 + $0x9c] sm:$0xf]
        %v775 = vld [vmem:[#allocation9 + $0xa0] sm:$0xf]
        %v776 = vld [vmem:[#allocation9 + $0xa4] sm:$0xf]
        %v777 = vld [vmem:[#allocation9 + $0xa8] sm:$0xf]
        %v778 = vld [vmem:[#allocation9 + $0xac] sm:$0xf]
        %v779 = vld [vmem:[#allocation9 + $0xb0] sm:$0xf]
        %v780 = vld [vmem:[#allocation9 + $0xb4] sm:$0xf]
        %v781 = vld [vmem:[#allocation9 + $0xb8] sm:$0xf]
        %v782 = vld [vmem:[#allocation9 + $0xbc] sm:$0xf]
        %v783 = vld [vmem:[%s4] sm:$0x1]
        %v785 = vlaneseq
        %v786 = vshrl.u32 %v785, 7
        %v787 = vsub.s32 0, %v786
        %v788 = vrot.slane %v783, %v787
        %v790 = vrot.slane %v723, 2
        %v791 = vrot.slane %v724, 2
        %v792 = vsel %vm458, %v790, %v791
        %v793 = vrot.slane %v733, 2
        %v794 = vrot.slane %v732, 2
        %v795 = vsel %vm458, %v793, %v794
        %v796 = vrot.slane %v734, 2
        %v797 = vsel %vm458, %v796, %v796
        %v849 = vunpack.c.l.b16 %v735
        %v850 = vunpack.c.l.b16 %v736
        %v851 = vunpack.c.l.b16 %v737
        %v852 = vunpack.c.l.b16 %v738
        %v853 = vunpack.c.l.b16 %v739
        %v854 = vunpack.c.l.b16 %v740
        %v855 = vunpack.c.l.b16 %v741
        %v856 = vunpack.c.l.b16 %v742
        %v857 = vunpack.c.l.b16 %v743
        %v858 = vunpack.c.l.b16 %v744
        %v859 = vunpack.c.l.b16 %v745
        %v860 = vunpack.c.l.b16 %v746
        %v861 = vunpack.c.l.b16 %v747
        %v862 = vunpack.c.l.b16 %v748
        %v863 = vunpack.c.l.b16 %v749
        %v864 = vunpack.c.l.b16 %v750
        %v865 = vunpack.c.l.b16 %v751
        %v866 = vunpack.c.l.b16 %v752
        %v867 = vunpack.c.l.b16 %v753
        %v868 = vunpack.c.l.b16 %v754
        %v869 = vunpack.c.l.b16 %v755
        %v870 = vunpack.c.l.b16 %v756
        %v871 = vunpack.c.l.b16 %v757
        %v872 = vunpack.c.l.b16 %v758
        %v873 = vunpack.c.l.b16 %v759
        %v874 = vunpack.c.l.b16 %v760
        %v875 = vunpack.c.l.b16 %v761
        %v876 = vunpack.c.l.b16 %v762
        %v877 = vunpack.c.l.b16 %v763
        %v878 = vunpack.c.l.b16 %v764
        %v879 = vunpack.c.l.b16 %v765
        %v880 = vunpack.c.l.b16 %v766
        %v881 = vunpack.c.l.b16 %v767
        %v882 = vunpack.c.l.b16 %v768
        %v883 = vunpack.c.l.b16 %v769
        %v884 = vunpack.c.l.b16 %v770
        %v885 = vunpack.c.l.b16 %v771
        %v886 = vunpack.c.l.b16 %v772
        %v887 = vunpack.c.l.b16 %v773
        %v888 = vunpack.c.l.b16 %v774
        %v889 = vunpack.c.l.b16 %v775
        %v890 = vunpack.c.l.b16 %v776
        %v891 = vunpack.c.l.b16 %v777
        %v892 = vunpack.c.l.b16 %v778
        %v893 = vunpack.c.l.b16 %v779
        %v894 = vunpack.c.l.b16 %v780
        %v895 = vunpack.c.l.b16 %v781
        %v896 = vunpack.c.l.b16 %v782
        %v897 = vpack.c.b16 %v850, %v849
        %v898 = vpack.c.b16 %v852, %v851
        %v899 = vpack.c.b16 %v854, %v853
        %v900 = vpack.c.b16 %v856, %v855
        %v901 = vpack.c.b16 %v858, %v857
        %v902 = vpack.c.b16 %v860, %v859
        %v903 = vpack.c.b16 %v862, %v861
        %v904 = vpack.c.b16 %v864, %v863
        %v905 = vpack.c.b16 %v866, %v865
        %v906 = vpack.c.b16 %v868, %v867
        %v907 = vpack.c.b16 %v870, %v869
        %v908 = vpack.c.b16 %v872, %v871
        %v909 = vpack.c.b16 %v874, %v873
        %v910 = vpack.c.b16 %v876, %v875
        %v911 = vpack.c.b16 %v878, %v877
        %v912 = vpack.c.b16 %v880, %v879
        %v913 = vpack.c.b16 %v882, %v881
        %v914 = vpack.c.b16 %v884, %v883
        %v915 = vpack.c.b16 %v886, %v885
        %v916 = vpack.c.b16 %v888, %v887
        %v917 = vpack.c.b16 %v890, %v889
        %v918 = vpack.c.b16 %v892, %v891
        %v919 = vpack.c.b16 %v894, %v893
        %v920 = vpack.c.b16 %v896, %v895
        %945 = vmatprep.subr.bf16.mxu0 0
        %946 = vmatpush1.bf16.msra.mxu0 %v904
        %947 = vmatprep.subr.bf16.mxu0 0
        %948 = vmatpush1.bf16.msra.mxu0 %v903
        %949 = vmatprep.subr.bf16.mxu0 0
        %950 = vmatpush1.bf16.msra.mxu0 %v902
        %951 = vmatprep.subr.bf16.mxu0 0
        %952 = vmatpush1.bf16.msra.mxu0 %v901
        %953 = vmatprep.subr.bf16.mxu0 0
        %954 = vmatpush1.bf16.msra.mxu0 %v900
        %955 = vmatprep.subr.bf16.mxu0 0
        %956 = vmatpush1.bf16.msra.mxu0 %v899
        %957 = vmatprep.subr.bf16.mxu0 0
        %958 = vmatpush1.bf16.msra.mxu0 %v898
        %959 = vmatprep.subr.bf16.mxu0 0
        %960 = vmatpush1.bf16.msra.mxu0 %v897
        %961 = vmatprep.subr.bf16.mxu0 0
        %962 = vmatpush2.bf16.msra.mxu0 %v912
        %963 = vmatprep.subr.bf16.mxu0 0
        %964 = vmatpush2.bf16.msra.mxu0 %v911
        %965 = vmatprep.subr.bf16.mxu0 0
        %966 = vmatpush2.bf16.msra.mxu0 %v910
        %967 = vmatprep.subr.bf16.mxu0 0
        %968 = vmatpush2.bf16.msra.mxu0 %v909
        %969 = vmatprep.subr.bf16.mxu0 0
        %970 = vmatpush2.bf16.msra.mxu0 %v908
        %971 = vmatprep.subr.bf16.mxu0 0
        %972 = vmatpush2.bf16.msra.mxu0 %v907
        %973 = vmatprep.subr.bf16.mxu0 0
        %974 = vmatpush2.bf16.msra.mxu0 %v906
        %975 = vmatprep.subr.bf16.mxu0 0
        %976 = vmatpush2.bf16.msra.mxu0 %v905
        %977 = vmatprep.mubr.bf16.mxu0 %v795
        %978 = vmatmul.mubr.bf16.gmra.mxu0 %v792
        %v979 = vpop.f32.mrf.mxu0
        %v980 = vadd.f32 %v788, %v979
        %v981 = vpop.f32.mrf.mxu0
        %v982 = vpop.f32.mrf.mxu0
        %v983 = vadd.f32 %v788, %v982
        %v984 = vpop.f32.mrf.mxu0
        %985 = vdwg.mxu0
        %986 = vmatprep.subr.bf16.mxu0 0
        %987 = vmatpush1.bf16.msra.mxu0 %v920
        %988 = vmatprep.subr.bf16.mxu0 0
        %989 = vmatpush1.bf16.msra.mxu0 %v919
        %990 = vmatprep.subr.bf16.mxu0 0
        %991 = vmatpush1.bf16.msra.mxu0 %v918
        %992 = vmatprep.subr.bf16.mxu0 0
        %993 = vmatpush1.bf16.msra.mxu0 %v917
        %994 = vmatprep.subr.bf16.mxu0 0
        %995 = vmatpush1.bf16.msra.mxu0 %v916
        %996 = vmatprep.subr.bf16.mxu0 0
        %997 = vmatpush1.bf16.msra.mxu0 %v915
        %998 = vmatprep.subr.bf16.mxu0 0
        %999 = vmatpush1.bf16.msra.mxu0 %v914
        %1000 = vmatprep.subr.bf16.mxu0 0
        %1001 = vmatpush1.bf16.msra.mxu0 %v913
        %1002 = vmatprep.subr.bf16.mxu0 0
        %1003 = vmatpush2.bf16.msra.mxu0 0
        %1004 = vmatprep.subr.bf16.mxu0 0
        %1005 = vmatpush2.bf16.msra.mxu0 0
        %1006 = vmatprep.subr.bf16.mxu0 0
        %1007 = vmatpush2.bf16.msra.mxu0 0
        %1008 = vmatprep.subr.bf16.mxu0 0
        %1009 = vmatpush2.bf16.msra.mxu0 0
        %1010 = vmatprep.subr.bf16.mxu0 0
        %1011 = vmatpush2.bf16.msra.mxu0 0
        %1012 = vmatprep.subr.bf16.mxu0 0
        %1013 = vmatpush2.bf16.msra.mxu0 0
        %1014 = vmatprep.subr.bf16.mxu0 0
        %1015 = vmatpush2.bf16.msra.mxu0 0
        %1016 = vmatprep.subr.bf16.mxu0 0
        %1017 = vmatpush2.bf16.msra.mxu0 0
        %1018 = vmatprep.mubr.bf16.mxu0 0
        %1019 = vmatmul.mubr.bf16.gmra.mxu0 %v797
        %v1020 = vpop.f32.mrf.mxu0
        %v1021 = vadd.f32 %v980, %v1020
        %v1022 = vpop.f32.mrf.mxu0
        %v1023 = vpop.f32.mrf.mxu0
        %v1024 = vadd.f32 %v983, %v1023
        %v1025 = vpop.f32.mrf.mxu0
        %1026 = vdwg.mxu0
        %vm1027 = vcmp.ge.f32.partialorder %v1021, 0.0
        %vm1028 = vcmp.ge.f32.partialorder %v1024, 0.0
        %v1029 = vmul.f32 %v1021, 0.01
        %v1030 = vmul.f32 %v1024, 0.01
        %v1031 = vsel %vm1027, %v1021, %v1029
        %v1032 = vsel %vm1028, %v1024, %v1030
        %v1033 = vld [vmem:[#allocation10] sm:$0xf]
        %v1034 = vld [vmem:[#allocation10 + $0x4] sm:$0xf]
        %v1035 = vld [vmem:[#allocation10 + $0x8] sm:$0xf]
        %v1036 = vld [vmem:[#allocation10 + $0xc] sm:$0xf]
        %v1037 = vld [vmem:[#allocation10 + $0x10] sm:$0xf]
        %v1038 = vld [vmem:[#allocation10 + $0x14] sm:$0xf]
        %v1039 = vld [vmem:[#allocation10 + $0x18] sm:$0xf]
        %v1040 = vld [vmem:[#allocation10 + $0x1c] sm:$0xf]
        %v1041 = vld [vmem:[#allocation10 + $0x20] sm:$0xf]
        %v1042 = vld [vmem:[#allocation10 + $0x24] sm:$0xf]
        %v1043 = vld [vmem:[#allocation10 + $0x28] sm:$0xf]
        %v1044 = vld [vmem:[#allocation10 + $0x2c] sm:$0xf]
        %v1045 = vld [vmem:[#allocation10 + $0x30] sm:$0xf]
        %v1046 = vld [vmem:[#allocation10 + $0x34] sm:$0xf]
        %v1047 = vld [vmem:[#allocation10 + $0x38] sm:$0xf]
        %v1048 = vld [vmem:[#allocation10 + $0x3c] sm:$0xf]
        %v1049 = vld [vmem:[%s6] sm:$0x1]
        %v1051 = vlaneseq
        %v1052 = vshrl.u32 %v1051, 7
        %v1053 = vsub.s32 0, %v1052
        %v1054 = vrot.slane %v1049, %v1053
        %v1073 = vunpack.c.l.b16 %v1033
        %v1074 = vunpack.c.l.b16 %v1034
        %v1075 = vunpack.c.l.b16 %v1035
        %v1076 = vunpack.c.l.b16 %v1036
        %v1077 = vunpack.c.l.b16 %v1037
        %v1078 = vunpack.c.l.b16 %v1038
        %v1079 = vunpack.c.l.b16 %v1039
        %v1080 = vunpack.c.l.b16 %v1040
        %v1081 = vunpack.c.l.b16 %v1041
        %v1082 = vunpack.c.l.b16 %v1042
        %v1083 = vunpack.c.l.b16 %v1043
        %v1084 = vunpack.c.l.b16 %v1044
        %v1085 = vunpack.c.l.b16 %v1045
        %v1086 = vunpack.c.l.b16 %v1046
        %v1087 = vunpack.c.l.b16 %v1047
        %v1088 = vunpack.c.l.b16 %v1048
        %v1089 = vpack.c.b16 %v1074, %v1073
        %v1090 = vpack.c.b16 %v1076, %v1075
        %v1091 = vpack.c.b16 %v1078, %v1077
        %v1092 = vpack.c.b16 %v1080, %v1079
        %v1093 = vpack.c.b16 %v1082, %v1081
        %v1094 = vpack.c.b16 %v1084, %v1083
        %v1095 = vpack.c.b16 %v1086, %v1085
        %v1096 = vpack.c.b16 %v1088, %v1087
        %1105 = vmatprep.subr.bf16.mxu0 0
        %1106 = vmatpush1.bf16.msra.mxu0 %v1096
        %1107 = vmatprep.subr.bf16.mxu0 0
        %1108 = vmatpush1.bf16.msra.mxu0 %v1095
        %1109 = vmatprep.subr.bf16.mxu0 0
        %1110 = vmatpush1.bf16.msra.mxu0 %v1094
        %1111 = vmatprep.subr.bf16.mxu0 0
        %1112 = vmatpush1.bf16.msra.mxu0 %v1093
        %1113 = vmatprep.subr.bf16.mxu0 0
        %1114 = vmatpush1.bf16.msra.mxu0 %v1092
        %1115 = vmatprep.subr.bf16.mxu0 0
        %1116 = vmatpush1.bf16.msra.mxu0 %v1091
        %1117 = vmatprep.subr.bf16.mxu0 0
        %1118 = vmatpush1.bf16.msra.mxu0 %v1090
        %1119 = vmatprep.subr.bf16.mxu0 0
        %1120 = vmatpush1.bf16.msra.mxu0 %v1089
        %1121 = vmatprep.subr.bf16.mxu0 0
        %1122 = vmatpush2.bf16.msra.mxu0 0
        %1123 = vmatprep.subr.bf16.mxu0 0
        %1124 = vmatpush2.bf16.msra.mxu0 0
        %1125 = vmatprep.subr.bf16.mxu0 0
        %1126 = vmatpush2.bf16.msra.mxu0 0
        %1127 = vmatprep.subr.bf16.mxu0 0
        %1128 = vmatpush2.bf16.msra.mxu0 0
        %1129 = vmatprep.subr.bf16.mxu0 0
        %1130 = vmatpush2.bf16.msra.mxu0 0
        %1131 = vmatprep.subr.bf16.mxu0 0
        %1132 = vmatpush2.bf16.msra.mxu0 0
        %1133 = vmatprep.subr.bf16.mxu0 0
        %1134 = vmatpush2.bf16.msra.mxu0 0
        %1135 = vmatprep.subr.bf16.mxu0 0
        %1136 = vmatpush2.bf16.msra.mxu0 0
        %1137 = vmatprep.mubr.bf16.mxu0 0
        %1138 = vmatmul.mubr.bf16.gmra.mxu0 %v401
        %v1139 = vpop.f32.mrf.mxu0
        %v1140 = vadd.f32 %v1054, %v1139
        %v1141 = vpop.f32.mrf.mxu0
        %v1142 = vpop.f32.mrf.mxu0
        %v1143 = vadd.f32 %v1054, %v1142
        %v1144 = vpop.f32.mrf.mxu0
        %1145 = vdwg.mxu0
        %v1146 = vadd.f32 %v1031, %v1140
        %v1147 = vadd.f32 %v1032, %v1143
        %v1148 = vpack.c.bf16 %v1147, %v1146
        %v1150 = vunpack.c.l.b16 %v1148
        %v1151 = vunpack.c.h.b16 %v1148
        %v1152 = vpack.c.b16 %v1150, %v1150
        %v1153 = vpack.c.b16 %v1151, %v1151
        %1156 = vst [vmem:[%s358] sm:$0xf] %v1152
        %1157 = vst [vmem:[%s358 + $0x4] sm:$0xf] %v1153
        %s1158 = sadd.s32 %s31, 1
        %p1159 = scmp.lt.s32.totalorder %s1158, 1
        // Predicated region
        $region69: #{tpu_custom_call.1} parent=47 // pred_check
          %p1160 = pneg %p1159
        $region70: #{tpu_custom_call.1} parent=47 // pred_check_branch
          %1162 = sbr.rel (%p1160) target = $region72
        $region71: #{tpu_custom_call.1} parent=47 // pred_region
          %v1163 = vld [vmem:[#allocation2 + $0xc] sm:$0xc]
          %1164 = vst [vmem:[#allocation2 + $0x4] sm:$0xc] %v1163
          %v1165 = vld [vmem:[#allocation3 + $0xc] sm:$0xc]
          %1166 = vst [vmem:[#allocation3 + $0x4] sm:$0xc] %v1165
        $region72: #{tpu_custom_call.1} parent=47 // pred_fallthru
          _
        %s1167 = sand.u32 %s202, 1
        %s1168 = scalar_lea.sflag [#allocation6], %s1167
        %s1169 = sand.u32 %s202, 1
        %s1170 = smul.addr %s1169, 8
        %s1171 = scalar_lea.vmem [#allocation12], %s1170
        // Predicated region
        $region73: #{tpu_custom_call.1} parent=47 // pred_check
          %p1172 = pneg %p212
        $region74: #{tpu_custom_call.1} parent=47 // pred_check_branch
          %1174 = sbr.rel (%p1172) target = $region76
        $region75: #{tpu_custom_call.1} parent=47 // pred_region
          %s1175 = smul.u32 2, %s31
          %s1177 = ssub.s32 128, 128
          %1178 = vsyncadd %s1168, %s1177
          %s1179 = smul.addr %s30, 2
          %s1180 = sadd.s32 %s1175, %s1179
          %s1181 = smul.addr %s1180, 64
          %s1182 = scalar_lea.hbm %s7, %s1181
          %s1183 = sshll.u32 %s1171, 4
          %s1184 = int_to_ptr.vmem [resolvable:$true] %s1183
          %1189 = dma.vmem_to_hbm [thread:$0]  %s1184, 128, %s1182, %s1168, 64, 64, 4
        $region76: #{tpu_custom_call.1} parent=47 // pred_fallthru
          _
      $region48: #{tpu_custom_call.1} parent=5 // pred_fallthru
        _
      %p1190 = scmp.le.s32.totalorder 2, %s21
      // Predicated region
      $region77: #{tpu_custom_call.1} parent=5 // pred_check
        %p1191 = pneg %p1190
      $region78: #{tpu_custom_call.1} parent=5 // pred_check_branch
        %1193 = sbr.rel (%p1191) target = $region80
      $region79: #{tpu_custom_call.1} parent=5 // pred_region
        %s1194 = ssub.s32 %s21, 2
        // Predicated region
        $region81: #{tpu_custom_call.1} parent=79 // pred_check
          %p1195 = pneg %p218
        $region82: #{tpu_custom_call.1} parent=79 // pred_check_branch
          %1197 = sbr.rel (%p1195) target = $region84
        $region83: #{tpu_custom_call.1} parent=79 // pred_region
          %s1198 = sand.u32 %s203, 1
          %s1199 = scalar_lea.sflag [#allocation6], %s1198
          %s1200 = sand.u32 %s203, 1
          %s1201 = smul.addr %s1200, 8
          %s1202 = scalar_lea.vmem [#allocation12], %s1201
          %1203 = dma.done %s1199, 128
        $region84: #{tpu_custom_call.1} parent=79 // pred_fallthru
          _
      $region80: #{tpu_custom_call.1} parent=5 // pred_fallthru
        _
    $region6: #{tpu_custom_call.1} parent=1 // loop_footer
      %s25 = sadd.s32 1, %s21
    $region7: #{tpu_custom_call.1} parent=1 // loop_footer_branch
      %20 = sbr.rel target = $region3
    $region8: #{tpu_custom_call.1} parent=1 // loop_exit
      _
    %1204 = vsyncpa [#allocation5], 1
    %s1205 = scalar_lea.sflag [#allocation5], 1
    %1206 = vsyncpa %s1205, 1
    %1207 = vsyncpa [#allocation8], 1
    %1208 = vsyncpa [#allocation11], 1
    %1209 = vsyncpa [#allocation6], 1
    %s1210 = scalar_lea.sflag [#allocation6], 1
    %1211 = vsyncpa %s1210, 1

// kernel: tpu_custom_call.1
$region0: #{tpu_custom_call.1}
  #allocation0 [shape = 'u32[]', space=smem, size = 0x4, offset = 0x4, fixed_abs, tag = 'smem constant byte address 0x4 - core index']
  #allocation1 [shape = 'u32[144,128]{1,0:T(1,128)}', space=vmem, size = 0x12000, scoped, tag = 'internal scratch']
  #allocation2 [shape = 'bf16[32,128]{1,0:T(8,128)(2,1)}', space=vmem, size = 0x2000, scoped, tag = 'scratch operand']
  #allocation3 [shape = 'bf16[32,128]{1,0:T(8,128)(2,1)}', space=vmem, size = 0x2000, scoped, tag = 'scratch operand']
  %s0 = inlined_call_operand.hbm [shape: bf16[2,16,128], index: 0, kind: input, shape index: {}]
  %s1 = inlined_call_operand.hbm [shape: bf16[384,128], index: 1, kind: input, shape index: {}]
  %s2 = inlined_call_operand.vmem [shape: f32[1,128], index: 2, kind: input, shape index: {}]
  %s3 = inlined_call_operand.hbm [shape: bf16[384,128], index: 3, kind: input, shape index: {}]
  %s4 = inlined_call_operand.vmem [shape: f32[1,128], index: 4, kind: input, shape index: {}]
  %s5 = inlined_call_operand.hbm [shape: bf16[128,128], index: 5, kind: input, shape index: {}]
  %s6 = inlined_call_operand.vmem [shape: f32[1,128], index: 6, kind: input, shape index: {}]
  %s7 = inlined_call_operand.hbm [shape: bf16[2,16,128], index: 7, kind: output, shape index: {}]
  %s8 = sld [smem:[#allocation0]]
  $region85: #{tpu_custom_call.1} parent=0
    _
  %s10 = ssub.s32 1, %s8
  %s11 = scalar_select 0, %s10, %s8
  $region1: #{tpu_custom_call.1} parent=0
    #allocation4 [shape = 'u8[8192]{0}', space=vmem, size = 0x2000, scoped, tag = 'input window, operand 0']
    #allocation5 [shape = 's32[2]{0}', space=sflag, size = 0x8, scoped, tag = 'scoped memory for tpu_custom_call.1']
    #allocation6 [shape = 's32[2]{0}', space=sflag, size = 0x8, scoped, tag = 'scoped memory for tpu_custom_call.1']
    #allocation7 [shape = 'u8[98304]{0}', space=vmem, size = 0x18000, scoped, tag = 'input window, operand 1, single buffered']
    #allocation8 [shape = 's32[1]{0}', space=sflag, size = 0x4, scoped, tag = 'scoped memory for tpu_custom_call.1']
    #allocation9 [shape = 'u8[98304]{0}', space=vmem, size = 0x18000, scoped, tag = 'input window, operand 3, single buffered']
    #allocation10 [shape = 'u8[32768]{0}', space=vmem, size = 0x8000, scoped, tag = 'input window, operand 5, single buffered']
    #allocation11 [shape = 's32[1]{0}', space=sflag, size = 0x4, scoped, tag = 'scoped memory for tpu_custom_call.1']
    #allocation12 [shape = 'u8[8192]{0}', space=vmem, size = 0x2000, scoped, tag = 'output window, operand 0']
    %12 = vsyncpa [#allocation5], 0
    %s13 = scalar_lea.sflag [#allocation5], 1
    %14 = vsyncpa %s13, 0
    %15 = vsyncpa [#allocation8], 0
    %16 = vsyncpa [#allocation11], 0
    %17 = vsyncpa [#allocation6], 0
    %s18 = scalar_lea.sflag [#allocation6], 1
    %19 = vsyncpa %s18, 0
    loop: start=0, step=1, limit=4
    $region2: #{tpu_custom_call.1} parent=1 // loop_pre_header
      _
    $region3: #{tpu_custom_call.1} parent=1 // loop_header
      %s21 = sphi 0, %s25
      %p22 = scmp.ge.s32.totalorder %s21, 4
      %s28 = sphi 0, %s40
      %s29 = sphi 0, %s36
      %s30 = sphi 0, %s28
      %s31 = sphi 0, %s29
      %s32 = sphi 0, %s30
      %s33 = sphi 0, %s31
      %s45 = sphi 0, %s47
      %s48 = sphi 0, %s45
      %s49 = sphi 0, %s48
      %s65 = sphi 0, %s49
      %s69 = sphi 0, %s69
      %s71 = sphi 0, %s69
      %s72 = sphi 0, %s71
      %s86 = sphi 0, %s72
      %s90 = sphi 0, %s90
      %s92 = sphi 0, %s90
      %s93 = sphi 0, %s92
      %s107 = sphi 0, %s93
      %s111 = sphi 0, %s111
      %s113 = sphi 0, %s111
      %s114 = sphi 0, %s113
      %s128 = sphi 0, %s114
      %s132 = sphi 0, %s132
      %s134 = sphi 0, %s132
      %s135 = sphi 0, %s134
      %s149 = sphi 0, %s135
      %s153 = sphi 0, %s153
      %s155 = sphi 0, %s153
      %s156 = sphi 0, %s155
      %s170 = sphi 0, %s156
      %s174 = sphi 0, %s174
      %s176 = sphi 0, %s174
      %s177 = sphi 0, %s176
      %s191 = sphi 0, %s177
      %s199 = sphi 0, %s201
      %s202 = sphi 0, %s199
      %s203 = sphi 0, %s202
      %s219 = sphi 0, %s203
    $region4: #{tpu_custom_call.1} parent=1 // loop_header_branch
      %24 = sbr.rel (%p22) target = $region8
    $region5: #{tpu_custom_call.1} parent=1 // loop_body
      %s26 = ssub.s32 %s21, 1
      %s27 = ssub.s32 %s21, 2
      %s34 = sadd.s32 1, %s29
      %p35 = scmp.ge.s32.totalorder %s34, 1
      %s36 = scalar_select %p35, 0, %s34
      %s37 = sadd.s32 1, %s28
      %s38 = scalar_select %p35, %s37, %s28
      %p39 = scmp.ge.s32.totalorder %s38, 2
      %s40 = scalar_select %p39, 0, %s38
      %s41 = ssub.s32 %s28, %s40
      %s42 = ssub.s32 %s29, %s36
      %s43 = sor.u32 %s41, %s42
      %p44 = scmp.eq.s32.totalorder %s43, 0
      %s46 = sadd.s32 %s45, 1
      %s47 = scalar_select %p44, %s45, %s46
      %p50 = pneg %p44
      %p51 = scmp.eq.s32.totalorder %s21, 1
      %p52 = por %p50, %p51
      %p53 = scmp.ne.s32.totalorder %s45, %s48
      %p54 = scmp.eq.s32.totalorder %s21, 0
      %p55 = por %p53, %p54
      %p56 = scmp.ne.s32.totalorder %s45, %s48
      %p57 = scmp.eq.s32.totalorder %s26, 1
      %p58 = por %p56, %p57
      %p59 = scmp.ne.s32.totalorder %s48, %s49
      %p60 = scmp.eq.s32.totalorder %s26, 0
      %p61 = por %p59, %p60
      %p62 = scmp.ne.s32.totalorder %s48, %s49
      %p63 = scmp.eq.s32.totalorder %s27, 1
      %p64 = por %p62, %p63
      %p66 = scmp.ne.s32.totalorder %s49, %s65
      %p67 = scmp.eq.s32.totalorder %s27, 0
      %p68 = por %p66, %p67
      %s70 = sadd.s32 %s69, 1
      %p73 = scmp.eq.s32.totalorder %s21, 1
      %p74 = scmp.ne.s32.totalorder %s69, %s71
      %p75 = scmp.eq.s32.totalorder %s21, 0
      %p76 = por %p74, %p75
      %p77 = scmp.ne.s32.totalorder %s69, %s71
      %p78 = scmp.eq.s32.totalorder %s26, 1
      %p79 = por %p77, %p78
      %p80 = scmp.ne.s32.totalorder %s71, %s72
      %p81 = scmp.eq.s32.totalorder %s26, 0
      %p82 = por %p80, %p81
      %p83 = scmp.ne.s32.totalorder %s71, %s72
      %p84 = scmp.eq.s32.totalorder %s27, 1
      %p85 = por %p83, %p84
      %p87 = scmp.ne.s32.totalorder %s72, %s86
      %p88 = scmp.eq.s32.totalorder %s27, 0
      %p89 = por %p87, %p88
      %s91 = sadd.s32 %s90, 1
      %p94 = scmp.eq.s32.totalorder %s21, 1
      %p95 = scmp.ne.s32.totalorder %s90, %s92
      %p96 = scmp.eq.s32.totalorder %s21, 0
      %p97 = por %p95, %p96
      %p98 = scmp.ne.s32.totalorder %s90, %s92
      %p99 = scmp.eq.s32.totalorder %s26, 1
      %p100 = por %p98, %p99
      %p101 = scmp.ne.s32.totalorder %s92, %s93
      %p102 = scmp.eq.s32.totalorder %s26, 0
      %p103 = por %p101, %p102
      %p104 = scmp.ne.s32.totalorder %s92, %s93
      %p105 = scmp.eq.s32.totalorder %s27, 1
      %p106 = por %p104, %p105
      %p108 = scmp.ne.s32.totalorder %s93, %s107
      %p109 = scmp.eq.s32.totalorder %s27, 0
      %p110 = por %p108, %p109
      %s112 = sadd.s32 %s111, 1
      %p115 = scmp.eq.s32.totalorder %s21, 1
      %p116 = scmp.ne.s32.totalorder %s111, %s113
      %p117 = scmp.eq.s32.totalorder %s21, 0
      %p118 = por %p116, %p117
      %p119 = scmp.ne.s32.totalorder %s111, %s113
      %p120 = scmp.eq.s32.totalorder %s26, 1
      %p121 = por %p119, %p120
      %p122 = scmp.ne.s32.totalorder %s113, %s114
      %p123 = scmp.eq.s32.totalorder %s26, 0
      %p124 = por %p122, %p123
      %p125 = scmp.ne.s32.totalorder %s113, %s114
      %p126 = scmp.eq.s32.totalorder %s27, 1
      %p127 = por %p125, %p126
      %p129 = scmp.ne.s32.totalorder %s114, %s128
      %p130 = scmp.eq.s32.totalorder %s27, 0
      %p131 = por %p129, %p130
      %s133 = sadd.s32 %s132, 1
      %p136 = scmp.eq.s32.totalorder %s21, 1
      %p137 = scmp.ne.s32.totalorder %s132, %s134
      %p138 = scmp.eq.s32.totalorder %s21, 0
      %p139 = por %p137, %p138
      %p140 = scmp.ne.s32.totalorder %s132, %s134
      %p141 = scmp.eq.s32.totalorder %s26, 1
      %p142 = por %p140, %p141
      %p143 = scmp.ne.s32.totalorder %s134, %s135
      %p144 = scmp.eq.s32.totalorder %s26, 0
      %p145 = por %p143, %p144
      %p146 = scmp.ne.s32.totalorder %s134, %s135
      %p147 = scmp.eq.s32.totalorder %s27, 1
      %p148 = por %p146, %p147
      %p150 = scmp.ne.s32.totalorder %s135, %s149
      %p151 = scmp.eq.s32.totalorder %s27, 0
      %p152 = por %p150, %p151
      %s154 = sadd.s32 %s153, 1
      %p157 = scmp.eq.s32.totalorder %s21, 1
      %p158 = scmp.ne.s32.totalorder %s153, %s155
      %p159 = scmp.eq.s32.totalorder %s21, 0
      %p160 = por %p158, %p159
      %p161 = scmp.ne.s32.totalorder %s153, %s155
      %p162 = scmp.eq.s32.totalorder %s26, 1
      %p163 = por %p161, %p162
      %p164 = scmp.ne.s32.totalorder %s155, %s156
      %p165 = scmp.eq.s32.totalorder %s26, 0
      %p166 = por %p164, %p165
      %p167 = scmp.ne.s32.totalorder %s155, %s156
      %p168 = scmp.eq.s32.totalorder %s27, 1
      %p169 = por %p167, %p168
      %p171 = scmp.ne.s32.totalorder %s156, %s170
      %p172 = scmp.eq.s32.totalorder %s27, 0
      %p173 = por %p171, %p172
      %s175 = sadd.s32 %s174, 1
      %p178 = scmp.eq.s32.totalorder %s21, 1
      %p179 = scmp.ne.s32.totalorder %s174, %s176
      %p180 = scmp.eq.s32.totalorder %s21, 0
      %p181 = por %p179, %p180
      %p182 = scmp.ne.s32.totalorder %s174, %s176
      %p183 = scmp.eq.s32.totalorder %s26, 1
      %p184 = por %p182, %p183
      %p185 = scmp.ne.s32.totalorder %s176, %s177
      %p186 = scmp.eq.s32.totalorder %s26, 0
      %p187 = por %p185, %p186
      %p188 = scmp.ne.s32.totalorder %s176, %s177
      %p189 = scmp.eq.s32.totalorder %s27, 1
      %p190 = por %p188, %p189
      %p192 = scmp.ne.s32.totalorder %s177, %s191
      %p193 = scmp.eq.s32.totalorder %s27, 0
      %p194 = por %p192, %p193
      %s195 = ssub.s32 %s28, %s40
      %s196 = ssub.s32 %s29, %s36
      %s197 = sor.u32 %s195, %s196
      %p198 = scmp.eq.s32.totalorder %s197, 0
      %s200 = sadd.s32 %s199, 1
      %s201 = scalar_select %p198, %s199, %s200
      %p204 = pneg %p198
      %p205 = scmp.eq.s32.totalorder %s21, 1
      %p206 = por %p204, %p205
      %p207 = scmp.ne.s32.totalorder %s199, %s202
      %p208 = scmp.eq.s32.totalorder %s21, 0
      %p209 = por %p207, %p208
      %p210 = scmp.ne.s32.totalorder %s199, %s202
      %p211 = scmp.eq.s32.totalorder %s26, 1
      %p212 = por %p210, %p211
      %p213 = scmp.ne.s32.totalorder %s202, %s203
      %p214 = scmp.eq.s32.totalorder %s26, 0
      %p215 = por %p213, %p214
      %p216 = scmp.ne.s32.totalorder %s202, %s203
      %p217 = scmp.eq.s32.totalorder %s27, 1
      %p218 = por %p216, %p217
      %p220 = scmp.ne.s32.totalorder %s203, %s219
      %p221 = scmp.eq.s32.totalorder %s27, 0
      %p222 = por %p220, %p221
      %p223 = scmp.le.s32.totalorder 1, %s21
      %p224 = scmp.lt.s32.totalorder %s21, 3
      %p225 = pnand %p223, %p224
      %p226 = pneg %p225
      // Predicated region
      $region9: #{tpu_custom_call.1} parent=5 // pred_check
        _
      $region10: #{tpu_custom_call.1} parent=5 // pred_check_branch
        %228 = sbr.rel (%p225) target = $region12
      $region11: #{tpu_custom_call.1} parent=5 // pred_region
        %s229 = ssub.s32 %s21, 1
        // Predicated region
        $region13: #{tpu_custom_call.1} parent=11 // pred_check
          %p230 = pneg %p82
        $region14: #{tpu_custom_call.1} parent=11 // pred_check_branch
          %232 = sbr.rel (%p230) target = $region16
        $region15: #{tpu_custom_call.1} parent=11 // pred_region
          %s234 = ssub.s32 3072, 3072
          %235 = vsyncadd [#allocation8], %s234
          %s236 = sshll.u32 [#allocation7], 4
          %s237 = int_to_ptr.vmem [resolvable:$true] %s236
          %242 = dma.hbm_to_vmem [thread:$0]  %s1, 3072, %s237, [#allocation8], 64, 64, 4
        $region16: #{tpu_custom_call.1} parent=11 // pred_fallthru
          _
        // Predicated region
        $region17: #{tpu_custom_call.1} parent=11 // pred_check
          %p243 = pneg %p103
        $region18: #{tpu_custom_call.1} parent=11 // pred_check_branch
          %245 = sbr.rel (%p243) target = $region20
        $region19: #{tpu_custom_call.1} parent=11 // pred_region
          _
        $region20: #{tpu_custom_call.1} parent=11 // pred_fallthru
          _
        // Predicated region
        $region21: #{tpu_custom_call.1} parent=11 // pred_check
          %p246 = pneg %p124
        $region22: #{tpu_custom_call.1} parent=11 // pred_check_branch
          %248 = sbr.rel (%p246) target = $region24
        $region23: #{tpu_custom_call.1} parent=11 // pred_region
          %s250 = ssub.s32 3072, 3072
          %251 = vsyncadd [#allocation8], %s250
          %s252 = sshll.u32 [#allocation9], 4
          %s253 = int_to_ptr.vmem [resolvable:$true] %s252
          %258 = dma.hbm_to_vmem [thread:$0]  %s3, 3072, %s253, [#allocation8], 64, 64, 4
        $region24: #{tpu_custom_call.1} parent=11 // pred_fallthru
          _
        // Predicated region
        $region25: #{tpu_custom_call.1} parent=11 // pred_check
          %p259 = pneg %p145
        $region26: #{tpu_custom_call.1} parent=11 // pred_check_branch
          %261 = sbr.rel (%p259) target = $region28
        $region27: #{tpu_custom_call.1} parent=11 // pred_region
          _
        $region28: #{tpu_custom_call.1} parent=11 // pred_fallthru
          _
        // Predicated region
        $region29: #{tpu_custom_call.1} parent=11 // pred_check
          %p262 = pneg %p166
        $region30: #{tpu_custom_call.1} parent=11 // pred_check_branch
          %264 = sbr.rel (%p262) target = $region32
        $region31: #{tpu_custom_call.1} parent=11 // pred_region
          %s266 = ssub.s32 1024, 1024
          %267 = vsyncadd [#allocation11], %s266
          %s268 = sshll.u32 [#allocation10], 4
          %s269 = int_to_ptr.vmem [resolvable:$true] %s268
          %274 = dma.hbm_to_vmem [thread:$0]  %s5, 1024, %s269, [#allocation11], 64, 64, 4
        $region32: #{tpu_custom_call.1} parent=11 // pred_fallthru
          _
        // Predicated region
        $region33: #{tpu_custom_call.1} parent=11 // pred_check
          %p275 = pneg %p187
        $region34: #{tpu_custom_call.1} parent=11 // pred_check_branch
          %277 = sbr.rel (%p275) target = $region36
        $region35: #{tpu_custom_call.1} parent=11 // pred_region
          _
        $region36: #{tpu_custom_call.1} parent=11 // pred_fallthru
          _
      $region12: #{tpu_custom_call.1} parent=5 // pred_fallthru
        _
      %p278 = scmp.lt.s32.totalorder %s21, 2
      // Predicated region
      $region37: #{tpu_custom_call.1} parent=5 // pred_check
        %p279 = pneg %p278
      $region38: #{tpu_custom_call.1} parent=5 // pred_check_branch
        %281 = sbr.rel (%p279) target = $region40
      $region39: #{tpu_custom_call.1} parent=5 // pred_region
        // Predicated region
        $region41: #{tpu_custom_call.1} parent=39 // pred_check
          %p282 = pneg %p55
        $region42: #{tpu_custom_call.1} parent=39 // pred_check_branch
          %284 = sbr.rel (%p282) target = $region44
        $region43: #{tpu_custom_call.1} parent=39 // pred_region
          %s285 = sand.u32 %s45, 1
          %s286 = scalar_lea.sflag [#allocation5], %s285
          %s287 = sand.u32 %s45, 1
          %s288 = smul.addr %s287, 8
          %s289 = scalar_lea.vmem [#allocation4], %s288
          %s290 = smul.u32 2, %s29
          %s292 = ssub.s32 128, 128
          %293 = vsyncadd %s286, %s292
          %s294 = smul.addr %s28, 2
          %s295 = sadd.s32 %s290, %s294
          %s296 = smul.addr %s295, 64
          %s297 = scalar_lea.hbm %s0, %s296
          %s298 = sshll.u32 %s289, 4
          %s299 = int_to_ptr.vmem [resolvable:$true] %s298
          %304 = dma.hbm_to_vmem [thread:$0]  %s297, 128, %s299, %s286, 64, 64, 4
        $region44: #{tpu_custom_call.1} parent=39 // pred_fallthru
          _
      $region40: #{tpu_custom_call.1} parent=5 // pred_fallthru
        _
      %p305 = scmp.le.s32.totalorder 1, %s21
      %p306 = scmp.lt.s32.totalorder %s21, 3
      %p307 = pnand %p305, %p306
      %p308 = pneg %p307
      // Predicated region
      $region45: #{tpu_custom_call.1} parent=5 // pred_check
        _
      $region46: #{tpu_custom_call.1} parent=5 // pred_check_branch
        %310 = sbr.rel (%p307) target = $region48
      $region47: #{tpu_custom_call.1} parent=5 // pred_region
        %s311 = ssub.s32 %s21, 1
        %s312 = sand.u32 %s48, 1
        %s313 = scalar_lea.sflag [#allocation5], %s312
        %s314 = sand.u32 %s48, 1
        %s315 = smul.addr %s314, 8
        %s316 = scalar_lea.vmem [#allocation4], %s315
        // Predicated region
        $region49: #{tpu_custom_call.1} parent=47 // pred_check
          %p317 = pneg %p61
        $region50: #{tpu_custom_call.1} parent=47 // pred_check_branch
          %319 = sbr.rel (%p317) target = $region52
        $region51: #{tpu_custom_call.1} parent=47 // pred_region
          %320 = dma.done %s313, 128
        $region52: #{tpu_custom_call.1} parent=47 // pred_fallthru
          _
        // Predicated region
        $region53: #{tpu_custom_call.1} parent=47 // pred_check
          %p321 = pneg %p82
        $region54: #{tpu_custom_call.1} parent=47 // pred_check_branch
          %323 = sbr.rel (%p321) target = $region56
        $region55: #{tpu_custom_call.1} parent=47 // pred_region
          %324 = dma.done [#allocation8], 3072
        $region56: #{tpu_custom_call.1} parent=47 // pred_fallthru
          _
        // Predicated region
        $region57: #{tpu_custom_call.1} parent=47 // pred_check
          %p325 = pneg %p124
        $region58: #{tpu_custom_call.1} parent=47 // pred_check_branch
          %327 = sbr.rel (%p325) target = $region60
        $region59: #{tpu_custom_call.1} parent=47 // pred_region
          %328 = dma.done [#allocation8], 3072
        $region60: #{tpu_custom_call.1} parent=47 // pred_fallthru
          _
        // Predicated region
        $region61: #{tpu_custom_call.1} parent=47 // pred_check
          %p329 = pneg %p166
        $region62: #{tpu_custom_call.1} parent=47 // pred_check_branch
          %331 = sbr.rel (%p329) target = $region64
        $region63: #{tpu_custom_call.1} parent=47 // pred_region
          %332 = dma.done [#allocation11], 1024
        $region64: #{tpu_custom_call.1} parent=47 // pred_fallthru
          _
        %s333 = sand.u32 %s48, 1
        %s334 = scalar_lea.sflag [#allocation5], %s333
        %s335 = sand.u32 %s48, 1
        %s336 = smul.addr %s335, 8
        %s337 = scalar_lea.vmem [#allocation4], %s336
        %p338 = pneg %p61
        %p339 = pneg %p58
        %p340 = pneg %p82
        %p341 = pneg %p79
        %p342 = pneg %p103
        %p343 = pneg %p100
        %p344 = pneg %p124
        %p345 = pneg %p121
        %p346 = pneg %p145
        %p347 = pneg %p142
        %p348 = pneg %p166
        %p349 = pneg %p163
        %p350 = pneg %p187
        %p351 = pneg %p184
        %p352 = pneg %p215
        %p353 = pneg %p212
        %s354 = sand.u32 %s202, 1
        %s355 = scalar_lea.sflag [#allocation6], %s354
        %s356 = sand.u32 %s202, 1
        %s357 = smul.addr %s356, 8
        %s358 = scalar_lea.vmem [#allocation12], %s357
        %s359 = smul.u32 2, %s31
        %s360 = smul.u32 2, %s31
        %p362 = scmp.eq.s32.totalorder %s31, 0
        // Predicated region
        $region65: #{tpu_custom_call.1} parent=47 // pred_check
          %p363 = pneg %p362
        $region66: #{tpu_custom_call.1} parent=47 // pred_check_branch
          %365 = sbr.rel (%p363) target = $region68
        $region67: #{tpu_custom_call.1} parent=47 // pred_region
          %366 = vst [vmem:[#allocation2] sm:$0xf] 0
          %367 = vst [vmem:[#allocation2 + $0x4] sm:$0xf] 0
          %368 = vst [vmem:[#allocation3] sm:$0xf] 0
          %369 = vst [vmem:[#allocation3 + $0x4] sm:$0xf] 0
        $region68: #{tpu_custom_call.1} parent=47 // pred_fallthru
          _
        %v370 = vld [vmem:[%s316] sm:$0xf]
        %v371 = vld [vmem:[%s316 + $0x4] sm:$0xf]
        %372 = vst [vmem:[#allocation2 + $0x8] sm:$0xf] %v370
        %373 = vst [vmem:[#allocation2 + $0xc] sm:$0xf] %v371
        %v374 = vld [vmem:[#allocation2 + $0x4] sm:$0xc]
        %v375 = vld [vmem:[#allocation2 + $0x8] sm:$0xf]
        %v376 = vld [vmem:[#allocation2 + $0xc] sm:$0x3]
        %v377 = vld [vmem:[#allocation2 + $0x4] sm:$0x8]
        %v378 = vld [vmem:[#allocation2 + $0xc] sm:$0x7]
        %v382 = vunpack.c.l.b16 %v374
        %v383 = vunpack.c.l.b16 %v375
        %v384 = vunpack.c.l.b16 %v376
        %v385 = vpack.c.b16 %v383, %v382
        %v386 = vpack.c.b16 %v384, %v384
        %v389 = vunpack.c.l.b16 %v377
        %v390 = vunpack.c.l.b16 %v378
        %v391 = vpack.c.b16 %v383, %v389
        %v392 = vpack.c.b16 %v390, %v390
        %vm393 = vcmask 1046528
        %v394 = vrot.slane %v391, 1
        %v395 = vrot.slane %v392, 1
        %v396 = vsel %vm393, %v394, %v395
        %v399 = vunpack.c.l.b16 %v370
        %v400 = vunpack.c.l.b16 %v371
        %v401 = vpack.c.b16 %v400, %v399
        %v402 = vrot.slane %v401, 6
        %v403 = vld [vmem:[#allocation7] sm:$0xf]
        %v404 = vld [vmem:[#allocation7 + $0x4] sm:$0xf]
        %v405 = vld [vmem:[#allocation7 + $0x8] sm:$0xf]
        %v406 = vld [vmem:[#allocation7 + $0xc] sm:$0xf]
        %v407 = vld [vmem:[#allocation7 + $0x10] sm:$0xf]
        %v408 = vld [vmem:[#allocation7 + $0x14] sm:$0xf]
        %v409 = vld [vmem:[#allocation7 + $0x18] sm:$0xf]
        %v410 = vld [vmem:[#allocation7 + $0x1c] sm:$0xf]
        %v411 = vld [vmem:[#allocation7 + $0x20] sm:$0xf]
        %v412 = vld [vmem:[#allocation7 + $0x24] sm:$0xf]
        %v413 = vld [vmem:[#allocation7 + $0x28] sm:$0xf]
        %v414 = vld [vmem:[#allocation7 + $0x2c] sm:$0xf]
        %v415 = vld [vmem:[#allocation7 + $0x30] sm:$0xf]
        %v416 = vld [vmem:[#allocation7 + $0x34] sm:$0xf]
        %v417 = vld [vmem:[#allocation7 + $0x38] sm:$0xf]
        %v418 = vld [vmem:[#allocation7 + $0x3c] sm:$0xf]
        %v419 = vld [vmem:[#allocation7 + $0x40] sm:$0xf]
        %v420 = vld [vmem:[#allocation7 + $0x44] sm:$0xf]
        %v421 = vld [vmem:[#allocation7 + $0x48] sm:$0xf]
        %v422 = vld [vmem:[#allocation7 + $0x4c] sm:$0xf]
        %v423 = vld [vmem:[#allocation7 + $0x50] sm:$0xf]
        %v424 = vld [vmem:[#allocation7 + $0x54] sm:$0xf]
        %v425 = vld [vmem:[#allocation7 + $0x58] sm:$0xf]
        %v426 = vld [vmem:[#allocation7 + $0x5c] sm:$0xf]
        %v427 = vld [vmem:[#allocation7 + $0x60] sm:$0xf]
        %v428 = vld [vmem:[#allocation7 + $0x64] sm:$0xf]
        %v429 = vld [vmem:[#allocation7 + $0x68] sm:$0xf]
        %v430 = vld [vmem:[#allocation7 + $0x6c] sm:$0xf]
        %v431 = vld [vmem:[#allocation7 + $0x70] sm:$0xf]
        %v432 = vld [vmem:[#allocation7 + $0x74] sm:$0xf]
        %v433 = vld [vmem:[#allocation7 + $0x78] sm:$0xf]
        %v434 = vld [vmem:[#allocation7 + $0x7c] sm:$0xf]
        %v435 = vld [vmem:[#allocation7 + $0x80] sm:$0xf]
        %v436 = vld [vmem:[#allocation7 + $0x84] sm:$0xf]
        %v437 = vld [vmem:[#allocation7 + $0x88] sm:$0xf]
        %v438 = vld [vmem:[#allocation7 + $0x8c] sm:$0xf]
        %v439 = vld [vmem:[#allocation7 + $0x90] sm:$0xf]
        %v440 = vld [vmem:[#allocation7 + $0x94] sm:$0xf]
        %v441 = vld [vmem:[#allocation7 + $0x98] sm:$0xf]
        %v442 = vld [vmem:[#allocation7 + $0x9c] sm:$0xf]
        %v443 = vld [vmem:[#allocation7 + $0xa0] sm:$0xf]
        %v444 = vld [vmem:[#allocation7 + $0xa4] sm:$0xf]
        %v445 = vld [vmem:[#allocation7 + $0xa8] sm:$0xf]
        %v446 = vld [vmem:[#allocation7 + $0xac] sm:$0xf]
        %v447 = vld [vmem:[#allocation7 + $0xb0] sm:$0xf]
        %v448 = vld [vmem:[#allocation7 + $0xb4] sm:$0xf]
        %v449 = vld [vmem:[#allocation7 + $0xb8] sm:$0xf]
        %v450 = vld [vmem:[#allocation7 + $0xbc] sm:$0xf]
        %v451 = vld [vmem:[%s2] sm:$0x1]
        %v453 = vlaneseq
        %v454 = vshrl.u32 %v453, 7
        %v455 = vsub.s32 0, %v454
        %v456 = vrot.slane %v451, %v455
        %vm458 = vcmask 1045504
        %v459 = vrot.slane %v385, 2
        %v460 = vrot.slane %v386, 2
        %v461 = vsel %vm458, %v459, %v460
        %v462 = vrot.slane %v396, 2
        %v463 = vrot.slane %v395, 2
        %v464 = vsel %vm458, %v462, %v463
        %v465 = vrot.slane %v402, 2
        %v466 = vsel %vm458, %v465, %v465
        %v518 = vunpack.c.l.b16 %v403
        %v519 = vunpack.c.l.b16 %v404
        %v520 = vunpack.c.l.b16 %v405
        %v521 = vunpack.c.l.b16 %v406
        %v522 = vunpack.c.l.b16 %v407
        %v523 = vunpack.c.l.b16 %v408
        %v524 = vunpack.c.l.b16 %v409
        %v525 = vunpack.c.l.b16 %v410
        %v526 = vunpack.c.l.b16 %v411
        %v527 = vunpack.c.l.b16 %v412
        %v528 = vunpack.c.l.b16 %v413
        %v529 = vunpack.c.l.b16 %v414
        %v530 = vunpack.c.l.b16 %v415
        %v531 = vunpack.c.l.b16 %v416
        %v532 = vunpack.c.l.b16 %v417
        %v533 = vunpack.c.l.b16 %v418
        %v534 = vunpack.c.l.b16 %v419
        %v535 = vunpack.c.l.b16 %v420
        %v536 = vunpack.c.l.b16 %v421
        %v537 = vunpack.c.l.b16 %v422
        %v538 = vunpack.c.l.b16 %v423
        %v539 = vunpack.c.l.b16 %v424
        %v540 = vunpack.c.l.b16 %v425
        %v541 = vunpack.c.l.b16 %v426
        %v542 = vunpack.c.l.b16 %v427
        %v543 = vunpack.c.l.b16 %v428
        %v544 = vunpack.c.l.b16 %v429
        %v545 = vunpack.c.l.b16 %v430
        %v546 = vunpack.c.l.b16 %v431
        %v547 = vunpack.c.l.b16 %v432
        %v548 = vunpack.c.l.b16 %v433
        %v549 = vunpack.c.l.b16 %v434
        %v550 = vunpack.c.l.b16 %v435
        %v551 = vunpack.c.l.b16 %v436
        %v552 = vunpack.c.l.b16 %v437
        %v553 = vunpack.c.l.b16 %v438
        %v554 = vunpack.c.l.b16 %v439
        %v555 = vunpack.c.l.b16 %v440
        %v556 = vunpack.c.l.b16 %v441
        %v557 = vunpack.c.l.b16 %v442
        %v558 = vunpack.c.l.b16 %v443
        %v559 = vunpack.c.l.b16 %v444
        %v560 = vunpack.c.l.b16 %v445
        %v561 = vunpack.c.l.b16 %v446
        %v562 = vunpack.c.l.b16 %v447
        %v563 = vunpack.c.l.b16 %v448
        %v564 = vunpack.c.l.b16 %v449
        %v565 = vunpack.c.l.b16 %v450
        %v566 = vpack.c.b16 %v519, %v518
        %v567 = vpack.c.b16 %v521, %v520
        %v568 = vpack.c.b16 %v523, %v522
        %v569 = vpack.c.b16 %v525, %v524
        %v570 = vpack.c.b16 %v527, %v526
        %v571 = vpack.c.b16 %v529, %v528
        %v572 = vpack.c.b16 %v531, %v530
        %v573 = vpack.c.b16 %v533, %v532
        %v574 = vpack.c.b16 %v535, %v534
        %v575 = vpack.c.b16 %v537, %v536
        %v576 = vpack.c.b16 %v539, %v538
        %v577 = vpack.c.b16 %v541, %v540
        %v578 = vpack.c.b16 %v543, %v542
        %v579 = vpack.c.b16 %v545, %v544
        %v580 = vpack.c.b16 %v547, %v546
        %v581 = vpack.c.b16 %v549, %v548
        %v582 = vpack.c.b16 %v551, %v550
        %v583 = vpack.c.b16 %v553, %v552
        %v584 = vpack.c.b16 %v555, %v554
        %v585 = vpack.c.b16 %v557, %v556
        %v586 = vpack.c.b16 %v559, %v558
        %v587 = vpack.c.b16 %v561, %v560
        %v588 = vpack.c.b16 %v563, %v562
        %v589 = vpack.c.b16 %v565, %v564
        %614 = vmatprep.subr.bf16.mxu0 0
        %615 = vmatpush1.bf16.msra.mxu0 %v573
        %616 = vmatprep.subr.bf16.mxu0 0
        %617 = vmatpush1.bf16.msra.mxu0 %v572
        %618 = vmatprep.subr.bf16.mxu0 0
        %619 = vmatpush1.bf16.msra.mxu0 %v571
        %620 = vmatprep.subr.bf16.mxu0 0
        %621 = vmatpush1.bf16.msra.mxu0 %v570
        %622 = vmatprep.subr.bf16.mxu0 0
        %623 = vmatpush1.bf16.msra.mxu0 %v569
        %624 = vmatprep.subr.bf16.mxu0 0
        %625 = vmatpush1.bf16.msra.mxu0 %v568
        %626 = vmatprep.subr.bf16.mxu0 0
        %627 = vmatpush1.bf16.msra.mxu0 %v567
        %628 = vmatprep.subr.bf16.mxu0 0
        %629 = vmatpush1.bf16.msra.mxu0 %v566
        %630 = vmatprep.subr.bf16.mxu0 0
        %631 = vmatpush2.bf16.msra.mxu0 %v581
        %632 = vmatprep.subr.bf16.mxu0 0
        %633 = vmatpush2.bf16.msra.mxu0 %v580
        %634 = vmatprep.subr.bf16.mxu0 0
        %635 = vmatpush2.bf16.msra.mxu0 %v579
        %636 = vmatprep.subr.bf16.mxu0 0
        %637 = vmatpush2.bf16.msra.mxu0 %v578
        %638 = vmatprep.subr.bf16.mxu0 0
        %639 = vmatpush2.bf16.msra.mxu0 %v577
        %640 = vmatprep.subr.bf16.mxu0 0
        %641 = vmatpush2.bf16.msra.mxu0 %v576
        %642 = vmatprep.subr.bf16.mxu0 0
        %643 = vmatpush2.bf16.msra.mxu0 %v575
        %644 = vmatprep.subr.bf16.mxu0 0
        %645 = vmatpush2.bf16.msra.mxu0 %v574
        %646 = vmatprep.mubr.bf16.mxu0 %v464
        %647 = vmatmul.mubr.bf16.gmra.mxu0 %v461
        %v648 = vpop.f32.mrf.mxu0
        %v649 = vadd.f32 %v456, %v648
        %v650 = vpop.f32.mrf.mxu0
        %v651 = vpop.f32.mrf.mxu0
        %v652 = vadd.f32 %v456, %v651
        %v653 = vpop.f32.mrf.mxu0
        %654 = vdwg.mxu0
        %655 = vmatprep.subr.bf16.mxu0 0
        %656 = vmatpush1.bf16.msra.mxu0 %v589
        %657 = vmatprep.subr.bf16.mxu0 0
        %658 = vmatpush1.bf16.msra.mxu0 %v588
        %659 = vmatprep.subr.bf16.mxu0 0
        %660 = vmatpush1.bf16.msra.mxu0 %v587
        %661 = vmatprep.subr.bf16.mxu0 0
        %662 = vmatpush1.bf16.msra.mxu0 %v586
        %663 = vmatprep.subr.bf16.mxu0 0
        %664 = vmatpush1.bf16.msra.mxu0 %v585
        %665 = vmatprep.subr.bf16.mxu0 0
        %666 = vmatpush1.bf16.msra.mxu0 %v584
        %667 = vmatprep.subr.bf16.mxu0 0
        %668 = vmatpush1.bf16.msra.mxu0 %v583
        %669 = vmatprep.subr.bf16.mxu0 0
        %670 = vmatpush1.bf16.msra.mxu0 %v582
        %671 = vmatprep.subr.bf16.mxu0 0
        %672 = vmatpush2.bf16.msra.mxu0 0
        %673 = vmatprep.subr.bf16.mxu0 0
        %674 = vmatpush2.bf16.msra.mxu0 0
        %675 = vmatprep.subr.bf16.mxu0 0
        %676 = vmatpush2.bf16.msra.mxu0 0
        %677 = vmatprep.subr.bf16.mxu0 0
        %678 = vmatpush2.bf16.msra.mxu0 0
        %679 = vmatprep.subr.bf16.mxu0 0
        %680 = vmatpush2.bf16.msra.mxu0 0
        %681 = vmatprep.subr.bf16.mxu0 0
        %682 = vmatpush2.bf16.msra.mxu0 0
        %683 = vmatprep.subr.bf16.mxu0 0
        %684 = vmatpush2.bf16.msra.mxu0 0
        %685 = vmatprep.subr.bf16.mxu0 0
        %686 = vmatpush2.bf16.msra.mxu0 0
        %687 = vmatprep.mubr.bf16.mxu0 0
        %688 = vmatmul.mubr.bf16.gmra.mxu0 %v466
        %v689 = vpop.f32.mrf.mxu0
        %v690 = vadd.f32 %v649, %v689
        %v691 = vpop.f32.mrf.mxu0
        %v692 = vpop.f32.mrf.mxu0
        %v693 = vadd.f32 %v652, %v692
        %v694 = vpop.f32.mrf.mxu0
        %695 = vdwg.mxu0
        %vm696 = vcmp.ge.f32.partialorder %v690, 0.0
        %vm697 = vcmp.ge.f32.partialorder %v693, 0.0
        %v698 = vmul.f32 %v690, 0.01
        %v699 = vmul.f32 %v693, 0.01
        %v700 = vsel %vm696, %v690, %v698
        %v701 = vsel %vm697, %v693, %v699
        %v702 = vpack.c.bf16 %v701, %v700
        %v704 = vunpack.c.l.b16 %v702
        %v705 = vunpack.c.h.b16 %v702
        %v706 = vpack.c.b16 %v704, %v704
        %v707 = vpack.c.b16 %v705, %v705
        %710 = vst [vmem:[#allocation3 + $0x8] sm:$0xf] %v706
        %711 = vst [vmem:[#allocation3 + $0xc] sm:$0xf] %v707
        %v712 = vld [vmem:[#allocation3 + $0x4] sm:$0xc]
        %v713 = vld [vmem:[#allocation3 + $0x8] sm:$0xf]
        %v714 = vld [vmem:[#allocation3 + $0xc] sm:$0x3]
        %v715 = vld [vmem:[#allocation3 + $0x4] sm:$0x8]
        %v716 = vld [vmem:[#allocation3 + $0xc] sm:$0x7]
        %v720 = vunpack.c.l.b16 %v712
        %v721 = vunpack.c.l.b16 %v713
        %v722 = vunpack.c.l.b16 %v714
        %v723 = vpack.c.b16 %v721, %v720
        %v724 = vpack.c.b16 %v722, %v722
        %v727 = vunpack.c.l.b16 %v715
        %v728 = vunpack.c.l.b16 %v716
        %v729 = vpack.c.b16 %v721, %v727
        %v730 = vpack.c.b16 %v728, %v728
        %v731 = vrot.slane %v729, 1
        %v732 = vrot.slane %v730, 1
        %v733 = vsel %vm393, %v731, %v732
        %v734 = vrot.slane %v702, 6
        %v735 = vld [vmem:[#allocation9] sm:$0xf]
        %v736 = vld [vmem:[#allocation9 + $0x4] sm:$0xf]
        %v737 = vld [vmem:[#allocation9 + $0x8] sm:$0xf]
        %v738 = vld [vmem:[#allocation9 + $0xc] sm:$0xf]
        %v739 = vld [vmem:[#allocation9 + $0x10] sm:$0xf]
        %v740 = vld [vmem:[#allocation9 + $0x14] sm:$0xf]
        %v741 = vld [vmem:[#allocation9 + $0x18] sm:$0xf]
        %v742 = vld [vmem:[#allocation9 + $0x1c] sm:$0xf]
        %v743 = vld [vmem:[#allocation9 + $0x20] sm:$0xf]
        %v744 = vld [vmem:[#allocation9 + $0x24] sm:$0xf]
        %v745 = vld [vmem:[#allocation9 + $0x28] sm:$0xf]
        %v746 = vld [vmem:[#allocation9 + $0x2c] sm:$0xf]
        %v747 = vld [vmem:[#allocation9 + $0x30] sm:$0xf]
        %v748 = vld [vmem:[#allocation9 + $0x34] sm:$0xf]
        %v749 = vld [vmem:[#allocation9 + $0x38] sm:$0xf]
        %v750 = vld [vmem:[#allocation9 + $0x3c] sm:$0xf]
        %v751 = vld [vmem:[#allocation9 + $0x40] sm:$0xf]
        %v752 = vld [vmem:[#allocation9 + $0x44] sm:$0xf]
        %v753 = vld [vmem:[#allocation9 + $0x48] sm:$0xf]
        %v754 = vld [vmem:[#allocation9 + $0x4c] sm:$0xf]
        %v755 = vld [vmem:[#allocation9 + $0x50] sm:$0xf]
        %v756 = vld [vmem:[#allocation9 + $0x54] sm:$0xf]
        %v757 = vld [vmem:[#allocation9 + $0x58] sm:$0xf]
        %v758 = vld [vmem:[#allocation9 + $0x5c] sm:$0xf]
        %v759 = vld [vmem:[#allocation9 + $0x60] sm:$0xf]
        %v760 = vld [vmem:[#allocation9 + $0x64] sm:$0xf]
        %v761 = vld [vmem:[#allocation9 + $0x68] sm:$0xf]
        %v762 = vld [vmem:[#allocation9 + $0x6c] sm:$0xf]
        %v763 = vld [vmem:[#allocation9 + $0x70] sm:$0xf]
        %v764 = vld [vmem:[#allocation9 + $0x74] sm:$0xf]
        %v765 = vld [vmem:[#allocation9 + $0x78] sm:$0xf]
        %v766 = vld [vmem:[#allocation9 + $0x7c] sm:$0xf]
        %v767 = vld [vmem:[#allocation9 + $0x80] sm:$0xf]
        %v768 = vld [vmem:[#allocation9 + $0x84] sm:$0xf]
        %v769 = vld [vmem:[#allocation9 + $0x88] sm:$0xf]
        %v770 = vld [vmem:[#allocation9 + $0x8c] sm:$0xf]
        %v771 = vld [vmem:[#allocation9 + $0x90] sm:$0xf]
        %v772 = vld [vmem:[#allocation9 + $0x94] sm:$0xf]
        %v773 = vld [vmem:[#allocation9 + $0x98] sm:$0xf]
        %v774 = vld [vmem:[#allocation9 + $0x9c] sm:$0xf]
        %v775 = vld [vmem:[#allocation9 + $0xa0] sm:$0xf]
        %v776 = vld [vmem:[#allocation9 + $0xa4] sm:$0xf]
        %v777 = vld [vmem:[#allocation9 + $0xa8] sm:$0xf]
        %v778 = vld [vmem:[#allocation9 + $0xac] sm:$0xf]
        %v779 = vld [vmem:[#allocation9 + $0xb0] sm:$0xf]
        %v780 = vld [vmem:[#allocation9 + $0xb4] sm:$0xf]
        %v781 = vld [vmem:[#allocation9 + $0xb8] sm:$0xf]
        %v782 = vld [vmem:[#allocation9 + $0xbc] sm:$0xf]
        %v783 = vld [vmem:[%s4] sm:$0x1]
        %v785 = vlaneseq
        %v786 = vshrl.u32 %v785, 7
        %v787 = vsub.s32 0, %v786
        %v788 = vrot.slane %v783, %v787
        %v790 = vrot.slane %v723, 2
        %v791 = vrot.slane %v724, 2
        %v792 = vsel %vm458, %v790, %v791
        %v793 = vrot.slane %v733, 2
        %v794 = vrot.slane %v732, 2
        %v795 = vsel %vm458, %v793, %v794
        %v796 = vrot.slane %v734, 2
        %v797 = vsel %vm458, %v796, %v796
        %v849 = vunpack.c.l.b16 %v735
        %v850 = vunpack.c.l.b16 %v736
        %v851 = vunpack.c.l.b16 %v737
        %v852 = vunpack.c.l.b16 %v738
        %v853 = vunpack.c.l.b16 %v739
        %v854 = vunpack.c.l.b16 %v740
        %v855 = vunpack.c.l.b16 %v741
        %v856 = vunpack.c.l.b16 %v742
        %v857 = vunpack.c.l.b16 %v743
        %v858 = vunpack.c.l.b16 %v744
        %v859 = vunpack.c.l.b16 %v745
        %v860 = vunpack.c.l.b16 %v746
        %v861 = vunpack.c.l.b16 %v747
        %v862 = vunpack.c.l.b16 %v748
        %v863 = vunpack.c.l.b16 %v749
        %v864 = vunpack.c.l.b16 %v750
        %v865 = vunpack.c.l.b16 %v751
        %v866 = vunpack.c.l.b16 %v752
        %v867 = vunpack.c.l.b16 %v753
        %v868 = vunpack.c.l.b16 %v754
        %v869 = vunpack.c.l.b16 %v755
        %v870 = vunpack.c.l.b16 %v756
        %v871 = vunpack.c.l.b16 %v757
        %v872 = vunpack.c.l.b16 %v758
        %v873 = vunpack.c.l.b16 %v759
        %v874 = vunpack.c.l.b16 %v760
        %v875 = vunpack.c.l.b16 %v761
        %v876 = vunpack.c.l.b16 %v762
        %v877 = vunpack.c.l.b16 %v763
        %v878 = vunpack.c.l.b16 %v764
        %v879 = vunpack.c.l.b16 %v765
        %v880 = vunpack.c.l.b16 %v766
        %v881 = vunpack.c.l.b16 %v767
        %v882 = vunpack.c.l.b16 %v768
        %v883 = vunpack.c.l.b16 %v769
        %v884 = vunpack.c.l.b16 %v770
        %v885 = vunpack.c.l.b16 %v771
        %v886 = vunpack.c.l.b16 %v772
        %v887 = vunpack.c.l.b16 %v773
        %v888 = vunpack.c.l.b16 %v774
        %v889 = vunpack.c.l.b16 %v775
        %v890 = vunpack.c.l.b16 %v776
        %v891 = vunpack.c.l.b16 %v777
        %v892 = vunpack.c.l.b16 %v778
        %v893 = vunpack.c.l.b16 %v779
        %v894 = vunpack.c.l.b16 %v780
        %v895 = vunpack.c.l.b16 %v781
        %v896 = vunpack.c.l.b16 %v782
        %v897 = vpack.c.b16 %v850, %v849
        %v898 = vpack.c.b16 %v852, %v851
        %v899 = vpack.c.b16 %v854, %v853
        %v900 = vpack.c.b16 %v856, %v855
        %v901 = vpack.c.b16 %v858, %v857
        %v902 = vpack.c.b16 %v860, %v859
        %v903 = vpack.c.b16 %v862, %v861
        %v904 = vpack.c.b16 %v864, %v863
        %v905 = vpack.c.b16 %v866, %v865
        %v906 = vpack.c.b16 %v868, %v867
        %v907 = vpack.c.b16 %v870, %v869
        %v908 = vpack.c.b16 %v872, %v871
        %v909 = vpack.c.b16 %v874, %v873
        %v910 = vpack.c.b16 %v876, %v875
        %v911 = vpack.c.b16 %v878, %v877
        %v912 = vpack.c.b16 %v880, %v879
        %v913 = vpack.c.b16 %v882, %v881
        %v914 = vpack.c.b16 %v884, %v883
        %v915 = vpack.c.b16 %v886, %v885
        %v916 = vpack.c.b16 %v888, %v887
        %v917 = vpack.c.b16 %v890, %v889
        %v918 = vpack.c.b16 %v892, %v891
        %v919 = vpack.c.b16 %v894, %v893
        %v920 = vpack.c.b16 %v896, %v895
        %945 = vmatprep.subr.bf16.mxu0 0
        %946 = vmatpush1.bf16.msra.mxu0 %v904
        %947 = vmatprep.subr.bf16.mxu0 0
        %948 = vmatpush1.bf16.msra.mxu0 %v903
        %949 = vmatprep.subr.bf16.mxu0 0
        %950 = vmatpush1.bf16.msra.mxu0 %v902
        %951 = vmatprep.subr.bf16.mxu0 0
        %952 = vmatpush1.bf16.msra.mxu0 %v901
        %953 = vmatprep.subr.bf16.mxu0 0
        %954 = vmatpush1.bf16.msra.mxu0 %v900
        %955 = vmatprep.subr.bf16.mxu0 0
        %956 = vmatpush1.bf16.msra.mxu0 %v899
        %957 = vmatprep.subr.bf16.mxu0 0
        %958 = vmatpush1.bf16.msra.mxu0 %v898
        %959 = vmatprep.subr.bf16.mxu0 0
        %960 = vmatpush1.bf16.msra.mxu0 %v897
        %961 = vmatprep.subr.bf16.mxu0 0
        %962 = vmatpush2.bf16.msra.mxu0 %v912
        %963 = vmatprep.subr.bf16.mxu0 0
        %964 = vmatpush2.bf16.msra.mxu0 %v911
        %965 = vmatprep.subr.bf16.mxu0 0
        %966 = vmatpush2.bf16.msra.mxu0 %v910
        %967 = vmatprep.subr.bf16.mxu0 0
        %968 = vmatpush2.bf16.msra.mxu0 %v909
        %969 = vmatprep.subr.bf16.mxu0 0
        %970 = vmatpush2.bf16.msra.mxu0 %v908
        %971 = vmatprep.subr.bf16.mxu0 0
        %972 = vmatpush2.bf16.msra.mxu0 %v907
        %973 = vmatprep.subr.bf16.mxu0 0
        %974 = vmatpush2.bf16.msra.mxu0 %v906
        %975 = vmatprep.subr.bf16.mxu0 0
        %976 = vmatpush2.bf16.msra.mxu0 %v905
        %977 = vmatprep.mubr.bf16.mxu0 %v795
        %978 = vmatmul.mubr.bf16.gmra.mxu0 %v792
        %v979 = vpop.f32.mrf.mxu0
        %v980 = vadd.f32 %v788, %v979
        %v981 = vpop.f32.mrf.mxu0
        %v982 = vpop.f32.mrf.mxu0
        %v983 = vadd.f32 %v788, %v982
        %v984 = vpop.f32.mrf.mxu0
        %985 = vdwg.mxu0
        %986 = vmatprep.subr.bf16.mxu0 0
        %987 = vmatpush1.bf16.msra.mxu0 %v920
        %988 = vmatprep.subr.bf16.mxu0 0
        %989 = vmatpush1.bf16.msra.mxu0 %v919
        %990 = vmatprep.subr.bf16.mxu0 0
        %991 = vmatpush1.bf16.msra.mxu0 %v918
        %992 = vmatprep.subr.bf16.mxu0 0
        %993 = vmatpush1.bf16.msra.mxu0 %v917
        %994 = vmatprep.subr.bf16.mxu0 0
        %995 = vmatpush1.bf16.msra.mxu0 %v916
        %996 = vmatprep.subr.bf16.mxu0 0
        %997 = vmatpush1.bf16.msra.mxu0 %v915
        %998 = vmatprep.subr.bf16.mxu0 0
        %999 = vmatpush1.bf16.msra.mxu0 %v914
        %1000 = vmatprep.subr.bf16.mxu0 0
        %1001 = vmatpush1.bf16.msra.mxu0 %v913
        %1002 = vmatprep.subr.bf16.mxu0 0
        %1003 = vmatpush2.bf16.msra.mxu0 0
        %1004 = vmatprep.subr.bf16.mxu0 0
        %1005 = vmatpush2.bf16.msra.mxu0 0
        %1006 = vmatprep.subr.bf16.mxu0 0
        %1007 = vmatpush2.bf16.msra.mxu0 0
        %1008 = vmatprep.subr.bf16.mxu0 0
        %1009 = vmatpush2.bf16.msra.mxu0 0
        %1010 = vmatprep.subr.bf16.mxu0 0
        %1011 = vmatpush2.bf16.msra.mxu0 0
        %1012 = vmatprep.subr.bf16.mxu0 0
        %1013 = vmatpush2.bf16.msra.mxu0 0
        %1014 = vmatprep.subr.bf16.mxu0 0
        %1015 = vmatpush2.bf16.msra.mxu0 0
        %1016 = vmatprep.subr.bf16.mxu0 0
        %1017 = vmatpush2.bf16.msra.mxu0 0
        %1018 = vmatprep.mubr.bf16.mxu0 0
        %1019 = vmatmul.mubr.bf16.gmra.mxu0 %v797
        %v1020 = vpop.f32.mrf.mxu0
        %v1021 = vadd.f32 %v980, %v1020
        %v1022 = vpop.f32.mrf.mxu0
        %v1023 = vpop.f32.mrf.mxu0
        %v1024 = vadd.f32 %v983, %v1023
        %v1025 = vpop.f32.mrf.mxu0
        %1026 = vdwg.mxu0
        %vm1027 = vcmp.ge.f32.partialorder %v1021, 0.0
        %vm1028 = vcmp.ge.f32.partialorder %v1024, 0.0
        %v1029 = vmul.f32 %v1021, 0.01
        %v1030 = vmul.f32 %v1024, 0.01
        %v1031 = vsel %vm1027, %v1021, %v1029
        %v1032 = vsel %vm1028, %v1024, %v1030
        %v1033 = vld [vmem:[#allocation10] sm:$0xf]
        %v1034 = vld [vmem:[#allocation10 + $0x4] sm:$0xf]
        %v1035 = vld [vmem:[#allocation10 + $0x8] sm:$0xf]
        %v1036 = vld [vmem:[#allocation10 + $0xc] sm:$0xf]
        %v1037 = vld [vmem:[#allocation10 + $0x10] sm:$0xf]
        %v1038 = vld [vmem:[#allocation10 + $0x14] sm:$0xf]
        %v1039 = vld [vmem:[#allocation10 + $0x18] sm:$0xf]
        %v1040 = vld [vmem:[#allocation10 + $0x1c] sm:$0xf]
        %v1041 = vld [vmem:[#allocation10 + $0x20] sm:$0xf]
        %v1042 = vld [vmem:[#allocation10 + $0x24] sm:$0xf]
        %v1043 = vld [vmem:[#allocation10 + $0x28] sm:$0xf]
        %v1044 = vld [vmem:[#allocation10 + $0x2c] sm:$0xf]
        %v1045 = vld [vmem:[#allocation10 + $0x30] sm:$0xf]
        %v1046 = vld [vmem:[#allocation10 + $0x34] sm:$0xf]
        %v1047 = vld [vmem:[#allocation10 + $0x38] sm:$0xf]
        %v1048 = vld [vmem:[#allocation10 + $0x3c] sm:$0xf]
        %v1049 = vld [vmem:[%s6] sm:$0x1]
        %v1051 = vlaneseq
        %v1052 = vshrl.u32 %v1051, 7
        %v1053 = vsub.s32 0, %v1052
        %v1054 = vrot.slane %v1049, %v1053
        %v1073 = vunpack.c.l.b16 %v1033
        %v1074 = vunpack.c.l.b16 %v1034
        %v1075 = vunpack.c.l.b16 %v1035
        %v1076 = vunpack.c.l.b16 %v1036
        %v1077 = vunpack.c.l.b16 %v1037
        %v1078 = vunpack.c.l.b16 %v1038
        %v1079 = vunpack.c.l.b16 %v1039
        %v1080 = vunpack.c.l.b16 %v1040
        %v1081 = vunpack.c.l.b16 %v1041
        %v1082 = vunpack.c.l.b16 %v1042
        %v1083 = vunpack.c.l.b16 %v1043
        %v1084 = vunpack.c.l.b16 %v1044
        %v1085 = vunpack.c.l.b16 %v1045
        %v1086 = vunpack.c.l.b16 %v1046
        %v1087 = vunpack.c.l.b16 %v1047
        %v1088 = vunpack.c.l.b16 %v1048
        %v1089 = vpack.c.b16 %v1074, %v1073
        %v1090 = vpack.c.b16 %v1076, %v1075
        %v1091 = vpack.c.b16 %v1078, %v1077
        %v1092 = vpack.c.b16 %v1080, %v1079
        %v1093 = vpack.c.b16 %v1082, %v1081
        %v1094 = vpack.c.b16 %v1084, %v1083
        %v1095 = vpack.c.b16 %v1086, %v1085
        %v1096 = vpack.c.b16 %v1088, %v1087
        %1105 = vmatprep.subr.bf16.mxu0 0
        %1106 = vmatpush1.bf16.msra.mxu0 %v1096
        %1107 = vmatprep.subr.bf16.mxu0 0
        %1108 = vmatpush1.bf16.msra.mxu0 %v1095
        %1109 = vmatprep.subr.bf16.mxu0 0
        %1110 = vmatpush1.bf16.msra.mxu0 %v1094
        %1111 = vmatprep.subr.bf16.mxu0 0
        %1112 = vmatpush1.bf16.msra.mxu0 %v1093
        %1113 = vmatprep.subr.bf16.mxu0 0
        %1114 = vmatpush1.bf16.msra.mxu0 %v1092
        %1115 = vmatprep.subr.bf16.mxu0 0
        %1116 = vmatpush1.bf16.msra.mxu0 %v1091
        %1117 = vmatprep.subr.bf16.mxu0 0
        %1118 = vmatpush1.bf16.msra.mxu0 %v1090
        %1119 = vmatprep.subr.bf16.mxu0 0
        %1120 = vmatpush1.bf16.msra.mxu0 %v1089
        %1121 = vmatprep.subr.bf16.mxu0 0
        %1122 = vmatpush2.bf16.msra.mxu0 0
        %1123 = vmatprep.subr.bf16.mxu0 0
        %1124 = vmatpush2.bf16.msra.mxu0 0
        %1125 = vmatprep.subr.bf16.mxu0 0
        %1126 = vmatpush2.bf16.msra.mxu0 0
        %1127 = vmatprep.subr.bf16.mxu0 0
        %1128 = vmatpush2.bf16.msra.mxu0 0
        %1129 = vmatprep.subr.bf16.mxu0 0
        %1130 = vmatpush2.bf16.msra.mxu0 0
        %1131 = vmatprep.subr.bf16.mxu0 0
        %1132 = vmatpush2.bf16.msra.mxu0 0
        %1133 = vmatprep.subr.bf16.mxu0 0
        %1134 = vmatpush2.bf16.msra.mxu0 0
        %1135 = vmatprep.subr.bf16.mxu0 0
        %1136 = vmatpush2.bf16.msra.mxu0 0
        %1137 = vmatprep.mubr.bf16.mxu0 0
        %1138 = vmatmul.mubr.bf16.gmra.mxu0 %v401
        %v1139 = vpop.f32.mrf.mxu0
        %v1140 = vadd.f32 %v1054, %v1139
        %v1141 = vpop.f32.mrf.mxu0
        %v1142 = vpop.f32.mrf.mxu0
        %v1143 = vadd.f32 %v1054, %v1142
        %v1144 = vpop.f32.mrf.mxu0
        %1145 = vdwg.mxu0
        %v1146 = vadd.f32 %v1031, %v1140
        %v1147 = vadd.f32 %v1032, %v1143
        %v1148 = vpack.c.bf16 %v1147, %v1146
        %v1150 = vunpack.c.l.b16 %v1148
        %v1151 = vunpack.c.h.b16 %v1148
        %v1152 = vpack.c.b16 %v1150, %v1150
        %v1153 = vpack.c.b16 %v1151, %v1151
        %1156 = vst [vmem:[%s358] sm:$0xf] %v1152
        %1157 = vst [vmem:[%s358 + $0x4] sm:$0xf] %v1153
        %s1158 = sadd.s32 %s31, 1
        %p1159 = scmp.lt.s32.totalorder %s1158, 1
        // Predicated region
        $region69: #{tpu_custom_call.1} parent=47 // pred_check
          %p1160 = pneg %p1159
        $region70: #{tpu_custom_call.1} parent=47 // pred_check_branch
          %1162 = sbr.rel (%p1160) target = $region72
        $region71: #{tpu_custom_call.1} parent=47 // pred_region
          %v1163 = vld [vmem:[#allocation2 + $0xc] sm:$0xc]
          %1164 = vst [vmem:[#allocation2 + $0x4] sm:$0xc] %v1163
          %v1165 = vld [vmem:[#allocation3 + $0xc] sm:$0xc]
          %1166 = vst [vmem:[#allocation3 + $0x4] sm:$0xc] %v1165
        $region72: #{tpu_custom_call.1} parent=47 // pred_fallthru
          _
        %s1167 = sand.u32 %s202, 1
        %s1168 = scalar_lea.sflag [#allocation6], %s1167
        %s1169 = sand.u32 %s202, 1
        %s1170 = smul.addr %s1169, 8
        %s1171 = scalar_lea.vmem [#allocation12], %s1170
        // Predicated region
        $region73: #{tpu_custom_call.1} parent=47 // pred_check
          %p1172 = pneg %p212
        $region74: #{tpu_custom_call.1} parent=47 // pred_check_branch
          %1174 = sbr.rel (%p1172) target = $region76
        $region75: #{tpu_custom_call.1} parent=47 // pred_region
          %s1175 = smul.u32 2, %s31
          %s1177 = ssub.s32 128, 128
          %1178 = vsyncadd %s1168, %s1177
          %s1179 = smul.addr %s30, 2
          %s1180 = sadd.s32 %s1175, %s1179
          %s1181 = smul.addr %s1180, 64
          %s1182 = scalar_lea.hbm %s7, %s1181
          %s1183 = sshll.u32 %s1171, 4
          %s1184 = int_to_ptr.vmem [resolvable:$true] %s1183
          %1189 = dma.vmem_to_hbm [thread:$0]  %s1184, 128, %s1182, %s1168, 64, 64, 4
        $region76: #{tpu_custom_call.1} parent=47 // pred_fallthru
          _
      $region48: #{tpu_custom_call.1} parent=5 // pred_fallthru
        _
      %p1190 = scmp.le.s32.totalorder 2, %s21
      // Predicated region
      $region77: #{tpu_custom_call.1} parent=5 // pred_check
        %p1191 = pneg %p1190
      $region78: #{tpu_custom_call.1} parent=5 // pred_check_branch
        %1193 = sbr.rel (%p1191) target = $region80
      $region79: #{tpu_custom_call.1} parent=5 // pred_region
        %s1194 = ssub.s32 %s21, 2
        // Predicated region
        $region81: #{tpu_custom_call.1} parent=79 // pred_check
          %p1195 = pneg %p218
        $region82: #{tpu_custom_call.1} parent=79 // pred_check_branch
          %1197 = sbr.rel (%p1195) target = $region84
        $region83: #{tpu_custom_call.1} parent=79 // pred_region
          %s1198 = sand.u32 %s203, 1
          %s1199 = scalar_lea.sflag [#allocation6], %s1198
          %s1200 = sand.u32 %s203, 1
          %s1201 = smul.addr %s1200, 8
          %s1202 = scalar_lea.vmem [#allocation12], %s1201
          %1203 = dma.done %s1199, 128
        $region84: #{tpu_custom_call.1} parent=79 // pred_fallthru
          _
      $region80: #{tpu_custom_call.1} parent=5 // pred_fallthru
        _
    $region6: #{tpu_custom_call.1} parent=1 // loop_footer
      %s25 = sadd.s32 1, %s21
    $region7: #{tpu_custom_call.1} parent=1 // loop_footer_branch
      %20 = sbr.rel target = $region3
    $region8: #{tpu_custom_call.1} parent=1 // loop_exit
      _
    %1204 = vsyncpa [#allocation5], 1
    %s1205 = scalar_lea.sflag [#allocation5], 1
    %1206 = vsyncpa %s1205, 1
    %1207 = vsyncpa [#allocation8], 1
    %1208 = vsyncpa [#allocation11], 1
    %1209 = vsyncpa [#allocation6], 1
    %s1210 = scalar_lea.sflag [#allocation6], 1
    %1211 = vsyncpa %s1210, 1

</llo_original>
